<compile_context>
chip_gen: v7x
topology: tpu7x:2x2x1
jax: 0.10.0
libtpu: 0.0.40
codegen_flags: <defaults>
</compile_context>

<pallas_src>
import functools

import jax
import jax.numpy as jnp
from jax.experimental import pallas as pl
from jax.experimental.pallas import tpu as pltpu


def _round_up(x, m):
    return ((x + m - 1) // m) * m


_VMEM_LIMIT = 32 * 1024 * 1024  # safe on v5e/v6e (128 MiB) and v7x (64 MiB physical)


# ----------------------------------------------------------------------------
# Fused (LayerNorm ->) Linear (-> QuickGELU) (-> +residual) kernel
# ----------------------------------------------------------------------------
def _fused_linear_kernel(x_ref, w_ref, b_ref, *rest, ln, residual, activation, eps):
    pos = 0
    if ln:
        g_ref, bb_ref = rest[0], rest[1]
        pos = 2
    if residual:
        r_ref = rest[pos]
        pos += 1
    o_ref = rest[pos]
    acc_ref = rest[pos + 1]

    k = pl.program_id(2)

    @pl.when(k == 0)
    def _init():
        acc_ref[...] = jnp.zeros_like(acc_ref)

    if ln:
        # LayerNorm prologue over the full feature axis (K is untiled when ln=True).
        x = x_ref[...].astype(jnp.float32)
        mu = jnp.mean(x, axis=-1, keepdims=True)
        var = jnp.mean(jnp.square(x - mu), axis=-1, keepdims=True)
        x = (x - mu) * jax.lax.rsqrt(var + eps)
        x = x * g_ref[...].astype(jnp.float32) + bb_ref[...].astype(jnp.float32)
        xb = x.astype(jnp.bfloat16)
    else:
        # No prologue: feed the MXU directly in bf16 (avoids a redundant f32 round-trip).
        xb = x_ref[...].astype(jnp.bfloat16)

    acc_ref[...] += jnp.dot(
        xb,
        w_ref[...].astype(jnp.bfloat16),
        preferred_element_type=jnp.float32,
    )

    @pl.when(k == pl.num_programs(2) - 1)
    def _finalize():
        y = acc_ref[...] + b_ref[...].astype(jnp.float32)
        if activation == "quickgelu":
            # QuickGELU (matches OpenAI CLIP): x * sigmoid(1.702 x)  (EUP transcendental)
            y = y * jax.nn.sigmoid(1.702 * y)
        if residual:
            y = y + r_ref[...].astype(jnp.float32)
        o_ref[...] = y.astype(o_ref.dtype)


def pallas_fused_linear(x, w, b, *, gamma=None, beta=None, residual=None,
                        activation=None, eps=1e-5, out_dtype=jnp.float32):
    """y = [ +residual ] [ act ] ( LN?(x) @ w + b ).   x:(M,K), w:(K,N) bf16."""
    ln = gamma is not None
    M, K = x.shape
    N = w.shape[1]

    # Tile sizes (multiples of (8,128) or full-dim blocks; re-derived per shape).
    tm = 256 if M > 256 else _round_up(M, 8)
    tn = 256 if N > 256 else N
    tk = K if ln else (512 if K > 512 else K)

    Mp = _round_up(M, tm)
    Np = _round_up(N, tn)
    Kp = _round_up(K, tk)

    xp = jnp.pad(x, ((0, Mp - M), (0, Kp - K))) if (Mp != M or Kp != K) else x
    wp = jnp.pad(w, ((0, Kp - K), (0, Np - N))) if (Kp != K or Np != N) else w
    bp = (jnp.pad(b, (0, Np - N)) if Np != N else b).reshape(1, Np)

    in_specs = [
        pl.BlockSpec((tm, tk), lambda i, j, k: (i, k)),
        pl.BlockSpec((tk, tn), lambda i, j, k: (k, j)),
        pl.BlockSpec((1, tn), lambda i, j, k: (0, j)),
    ]
    args = [xp, wp, bp]
    if ln:
        in_specs += [
            pl.BlockSpec((1, K), lambda i, j, k: (0, 0)),
            pl.BlockSpec((1, K), lambda i, j, k: (0, 0)),
        ]
        args += [gamma.reshape(1, K), beta.reshape(1, K)]
    if residual is not None:
        rp = residual
        if Mp != M or Np != N:
            rp = jnp.pad(residual, ((0, Mp - M), (0, Np - N)))
        in_specs.append(pl.BlockSpec((tm, tn), lambda i, j, k: (i, j)))
        args.append(rp)

    kernel = functools.partial(
        _fused_linear_kernel,
        ln=ln, residual=residual is not None, activation=activation, eps=eps)

    out = pl.pallas_call(
        kernel,
        out_shape=jax.ShapeDtypeStruct((Mp, Np), out_dtype),
        grid=(Mp // tm, Np // tn, Kp // tk),
        in_specs=in_specs,
        out_specs=pl.BlockSpec((tm, tn), lambda i, j, k: (i, j)),
        scratch_shapes=[pltpu.VMEM((tm, tn), jnp.float32)],
        compiler_params=pltpu.CompilerParams(
            dimension_semantics=("parallel", "parallel", "arbitrary"),
            vmem_limit_bytes=_VMEM_LIMIT),
        cost_estimate=pl.CostEstimate(
            flops=2 * Mp * Np * Kp,
            transcendentals=(Mp * Np if activation else 0),
            bytes_accessed=(Mp * Kp + Mp * Np) * 4 + Kp * Np * 2),
    )(*args)

    if Mp != M or Np != N:
        out = out[:M, :N]
    return out


# ----------------------------------------------------------------------------
# Row-tiled LayerNorm (used standalone only for ln_pre)
# ----------------------------------------------------------------------------
def _layernorm_kernel(x_ref, g_ref, b_ref, o_ref, *, eps):
    x = x_ref[...].astype(jnp.float32)
    mu = jnp.mean(x, axis=-1, keepdims=True)
    var = jnp.mean(jnp.square(x - mu), axis=-1, keepdims=True)
    y = (x - mu) * jax.lax.rsqrt(var + eps)
    o_ref[...] = (y * g_ref[...].astype(jnp.float32)
                  + b_ref[...].astype(jnp.float32)).astype(o_ref.dtype)


def pallas_layernorm(x, gamma, beta, eps=1e-5):
    M, D = x.shape
    tm = 512 if M > 512 else _round_up(M, 8)
    Mp = _round_up(M, tm)
    xp = jnp.pad(x, ((0, Mp - M), (0, 0))) if Mp != M else x
    out = pl.pallas_call(
        functools.partial(_layernorm_kernel, eps=eps),
        out_shape=jax.ShapeDtypeStruct((Mp, D), x.dtype),
        grid=(Mp // tm,),
        in_specs=[
            pl.BlockSpec((tm, D), lambda i: (i, 0)),
            pl.BlockSpec((1, D), lambda i: (0, 0)),
            pl.BlockSpec((1, D), lambda i: (0, 0)),
        ],
        out_specs=pl.BlockSpec((tm, D), lambda i: (i, 0)),
        compiler_params=pltpu.CompilerParams(
            dimension_semantics=("parallel",),
            vmem_limit_bytes=_VMEM_LIMIT),
    )(xp, gamma.reshape(1, D), beta.reshape(1, D))
    return out[:M] if Mp != M else out


# ----------------------------------------------------------------------------
# Attention: per (batch, head-group) softmax(q k^T / sqrt(d)) v
# ----------------------------------------------------------------------------
def _attention_kernel(q_ref, k_ref, v_ref, o_ref, *, hd, hpb, scale):
    outs = []
    for h in range(hpb):
        sl = slice(h * hd, (h + 1) * hd)
        q = (q_ref[0, :, sl].astype(jnp.float32) * scale).astype(jnp.bfloat16)
        kk = k_ref[0, :, sl].astype(jnp.bfloat16)
        v = v_ref[0, :, sl].astype(jnp.bfloat16)
        # contract on the head dim of both q and k -> no materialized transpose
        s = jax.lax.dot_general(q, kk, (((1,), (1,)), ((), ())),
                                preferred_element_type=jnp.float32)
        m = jnp.max(s, axis=-1, keepdims=True)
        p = jnp.exp(s - m)
        l = jnp.sum(p, axis=-1, keepdims=True)
        o = jnp.dot(p.astype(jnp.bfloat16), v, preferred_element_type=jnp.float32)
        o = o * pl.reciprocal(l, approx=True)   # normalize the (N, hd) output, not p
        outs.append(o)
    # concatenate heads -> one wide (lane-dense) store
    o_ref[0] = jnp.concatenate(outs, axis=-1).astype(o_ref.dtype)


def pallas_attention_qkv(qkv, scale, heads, width):
    """qkv: (B, N, 3*width) with heads interleaved inside each width chunk.

    Returns (B, N, width).  q/k/v are read straight out of the fused QKV buffer
    via offset column BlockSpecs whenever the per-group lane width is 128-aligned,
    avoiding any XLA slice/copy of q, k, v.
    """
    B, N, threeD = qkv.shape
    D = width
    hd = D // heads

    # choose heads-per-block so the per-group lane width is a multiple of 128
    hpb = heads
    for cand in range(1, heads + 1):
        if heads % cand == 0 and (cand * hd) % 128 == 0:
            hpb = cand
            break
    L = hpb * hd
    n_groups = heads // hpb
    kernel = functools.partial(_attention_kernel, hd=hd, hpb=hpb, scale=scale)

    out_spec = pl.BlockSpec((1, N, L), lambda b, h: (b, 0, h))
    compiler_params = pltpu.CompilerParams(
        dimension_semantics=("parallel", "parallel"),
        vmem_limit_bytes=_VMEM_LIMIT)

    if L % 128 == 0:
        # Direct column views of the (B, N, 3D) QKV buffer (no slices materialized).
        off_k = D // L
        off_v = 2 * (D // L)
        return pl.pallas_call(
            kernel,
            out_shape=jax.ShapeDtypeStruct((B, N, D), qkv.dtype),
            grid=(B, n_groups),
            in_specs=[
                pl.BlockSpec((1, N, L), lambda b, h: (b, 0, h)),
                pl.BlockSpec((1, N, L), lambda b, h: (b, 0, h + off_k)),
                pl.BlockSpec((1, N, L), lambda b, h: (b, 0, h + off_v)),
            ],
            out_specs=out_spec,
            compiler_params=compiler_params,
        )(qkv, qkv, qkv)

    # Fallback: split q/k/v once (block last dim == full array dim, so layout rules hold).
    q, k, v = qkv[:, :, :D], qkv[:, :, D:2 * D], qkv[:, :, 2 * D:]
    spec = pl.BlockSpec((1, N, L), lambda b, h: (b, 0, h))
    return pl.pallas_call(
        kernel,
        out_shape=jax.ShapeDtypeStruct((B, N, D), qkv.dtype),
        grid=(B, n_groups),
        in_specs=[spec, spec, spec],
        out_specs=out_spec,
        compiler_params=compiler_params,
    )(q, k, v)


# ----------------------------------------------------------------------------
# CLIP ViT image encoder (synthetic weights): ClipEnc.forward == m.encode_image
# ----------------------------------------------------------------------------
class ClipImageEncoderParams:
    def __init__(self, key, *, in_ch, image_size, patch, width, heads, layers,
                 mlp_dim, embed_dim):
        self.in_ch, self.patch = in_ch, patch
        self.width, self.heads, self.layers = width, heads, layers
        self.head_dim = width // heads
        self.mlp_dim, self.embed_dim = mlp_dim, embed_dim
        n_patches = (image_size // patch) ** 2
        self.n_tokens = n_patches + 1

        def nrm(k, shape, std=0.02, dtype=jnp.float32):
            return (std * jax.random.normal(k, shape)).astype(dtype)

        keys = iter(jax.random.split(key, 8 + 6 * layers))
        patch_feat = in_ch * patch * patch
        # conv1 (patch embed) as a matmul weight, flattened in (c, ph, pw) order
        self.w_patch = nrm(next(keys), (patch_feat, width), dtype=jnp.bfloat16)
        self.b_patch = jnp.zeros((width,), jnp.float32)
        self.class_embedding = nrm(next(keys), (width,))
        self.pos_embed = nrm(next(keys), (self.n_tokens, width), std=0.01)
        self.ln_pre_g = jnp.ones((width,), jnp.float32)
        self.ln_pre_b = jnp.zeros((width,), jnp.float32)
        self.ln_post_g = jnp.ones((width,), jnp.float32)
        self.ln_post_b = jnp.zeros((width,), jnp.float32)
        self.proj = nrm(next(keys), (width, embed_dim), dtype=jnp.bfloat16)
        self.proj_b = jnp.zeros((embed_dim,), jnp.float32)

        self.blocks = []
        for _ in range(layers):
            blk = dict(
                ln1_g=jnp.ones((width,), jnp.float32),
                ln1_b=jnp.zeros((width,), jnp.float32),
                w_qkv=nrm(next(keys), (width, 3 * width), dtype=jnp.bfloat16),
                b_qkv=jnp.zeros((3 * width,), jnp.float32),
                w_out=nrm(next(keys), (width, width), dtype=jnp.bfloat16),
                b_out=jnp.zeros((width,), jnp.float32),
                ln2_g=jnp.ones((width,), jnp.float32),
                ln2_b=jnp.zeros((width,), jnp.float32),
                w_fc1=nrm(next(keys), (width, mlp_dim), dtype=jnp.bfloat16),
                b_fc1=jnp.zeros((mlp_dim,), jnp.float32),
                w_fc2=nrm(next(keys), (mlp_dim, width), dtype=jnp.bfloat16),
                b_fc2=jnp.zeros((width,), jnp.float32),
            )
            self.blocks.append(blk)


def clip_encode_image(params, im):
    """im: NCHW float32 image. Returns (B, embed_dim) embedding."""
    B, C, H, W = im.shape
    p = params.patch
    D = params.width
    nh, nw = H // p, W // p
    n_patches = nh * nw
    N = n_patches + 1  # +1 class token

    # --- patch embed: stride==kernel conv == reshape + matmul (matmul in Pallas)
    patches = im.reshape(B, C, nh, p, nw, p)
    patches = patches.transpose(0, 2, 4, 1, 3, 5)                 # (B, nh, nw, C, p, p)
    patches = patches.reshape(B * n_patches, C * p * p)           # flatten (c, ph, pw)
    x = pallas_fused_linear(patches, params.w_patch, params.b_patch)
    x = x.reshape(B, n_patches, D)

    # --- prepend class token, add (learned) positional embedding
    cls = jnp.broadcast_to(params.class_embedding.reshape(1, 1, D), (B, 1, D))
    x = jnp.concatenate([cls, x], axis=1)                         # (B, N, D)
    x = x + params.pos_embed[None]

    # --- ln_pre (row-tiled standalone LN; its output is the residual stream)
    x2d = pallas_layernorm(x.reshape(B * N, D), params.ln_pre_g, params.ln_pre_b)

    # --- transformer blocks (pre-LN residual blocks)
    heads = params.heads
    scale = 1.0 / (params.head_dim ** 0.5)
    for blk in params.blocks:
        # fused LN1 + qkv projection (bf16 output: only feeds the attention matmuls)
        qkv = pallas_fused_linear(x2d, blk["w_qkv"], blk["b_qkv"],
                                  gamma=blk["ln1_g"], beta=blk["ln1_b"],
                                  out_dtype=jnp.bfloat16)          # (B*N, 3D)
        a = pallas_attention_qkv(qkv.reshape(B, N, 3 * D), scale, heads, D)  # (B, N, D) bf16
        # fused out-proj + residual add (residual stream stays f32)
        x2d = pallas_fused_linear(a.reshape(B * N, D), blk["w_out"], blk["b_out"],
                                  residual=x2d)
        # fused LN2 + fc1 + QuickGELU (bf16 hidden: only feeds fc2's matmul)
        h = pallas_fused_linear(x2d, blk["w_fc1"], blk["b_fc1"],
                                gamma=blk["ln2_g"], beta=blk["ln2_b"],
                                activation="quickgelu", out_dtype=jnp.bfloat16)
        # fused fc2 + residual add
        x2d = pallas_fused_linear(h, blk["w_fc2"], blk["b_fc2"], residual=x2d)

    # --- ln_post fused into the final projection, applied to the class token
    cls_tok = x2d.reshape(B, N, D)[:, 0, :]                       # (B, D)
    e = pallas_fused_linear(cls_tok, params.proj, params.proj_b,
                            gamma=params.ln_post_g, beta=params.ln_post_b)
    return e                                                      # (B, embed_dim)


# ClipEnc equivalent: forward(im) = m.encode_image(im)
def clip_enc_forward(params, im):
    return clip_encode_image(params, im)


if __name__ == "__main__":
    key = jax.random.PRNGKey(0)
    k_param, k_img = jax.random.split(key)

    B, C, H, W = 2, 3, 16, 16
    params = ClipImageEncoderParams(
        k_param, in_ch=C, image_size=H, patch=8, width=32, heads=2, layers=2,
        mlp_dim=128, embed_dim=16,
    )
    im = jax.random.normal(k_img, (B, C, H, W), dtype=jnp.float32)

    forward = jax.jit(lambda x: clip_enc_forward(params, x))
    out = forward(im)
    out = jax.block_until_ready(out)
    assert out.shape == (B, 16), out.shape
    assert bool(jnp.all(jnp.isfinite(out)))
    print("KERNEL_OK")
</pallas_src>

<mosaic_0001>
module attributes {stable_mosaic.version = 11 : i64} {
  func.func @_fused_linear_kernel(%arg0: i32, %arg1: i32, %arg2: i32, %arg3: memref<8x192xf32, #tpu.memory_space<vmem>>, %arg4: memref<192x32xbf16, #tpu.memory_space<vmem>>, %arg5: memref<1x32xf32, #tpu.memory_space<vmem>>, %arg6: memref<8x32xf32, #tpu.memory_space<vmem>>, %arg7: memref<8x32xf32, #tpu.memory_space<vmem>>) attributes {dimension_semantics = [#tpu.dimension_semantics<parallel>, #tpu.dimension_semantics<parallel>, #tpu.dimension_semantics<arbitrary>], iteration_bounds = array<i64: 1, 1, 1>, scalar_prefetch = 0 : i64, scratch_operands = 1 : i64, tpu.core_type = #tpu.core_type<tc>, window_params = [{transform_indices = @transform_0, window_bounds = array<i64: 8, 192>}, {transform_indices = @transform_1, window_bounds = array<i64: 192, 32>}, {transform_indices = @transform_2, window_bounds = array<i64: 1, 32>}, {transform_indices = @transform_3, window_bounds = array<i64: 8, 32>}]} {
    %c0_i32 = arith.constant 0 : i32
    %0 = arith.cmpi eq, %arg2, %c0_i32 : i32
    %1 = arith.extui %0 : i1 to i32
    %c0_i32_0 = arith.constant 0 : i32
    %2 = arith.cmpi ne, %1, %c0_i32_0 : i32
    scf.if %2 {
      %cst_10 = arith.constant 0.000000e+00 : f32
      %13 = vector.broadcast %cst_10 : f32 to vector<8x32xf32>
      %c0_11 = arith.constant 0 : index
      %c0_12 = arith.constant 0 : index
      %14 = vector.load %arg7[%c0_11, %c0_12] : memref<8x32xf32, #tpu.memory_space<vmem>>, vector<8x32xf32>
      tpu.vector_store %arg7[%c0_11, %c0_12], %13 {strides = array<i32>} : memref<8x32xf32, #tpu.memory_space<vmem>>, vector<8x32xf32>,
    } else {
    }
    %c0 = arith.constant 0 : index
    %c0_1 = arith.constant 0 : index
    %3 = vector.load %arg3[%c0, %c0_1] : memref<8x192xf32, #tpu.memory_space<vmem>>, vector<8x192xf32>
    %4 = arith.truncf %3 : vector<8x192xf32> to vector<8x192xbf16>
    %c0_2 = arith.constant 0 : index
    %c0_3 = arith.constant 0 : index
    %5 = vector.load %arg7[%c0_2, %c0_3] : memref<8x32xf32, #tpu.memory_space<vmem>>, vector<8x32xf32>
    %c0_4 = arith.constant 0 : index
    %c0_5 = arith.constant 0 : index
    %6 = vector.load %arg4[%c0_4, %c0_5] : memref<192x32xbf16, #tpu.memory_space<vmem>>, vector<192x32xbf16>
    %cst = arith.constant dense<0.000000e+00> : vector<8x32xf32>
    %7 = tpu.matmul %4, %6, %cst {dimension_numbers = #tpu.dot_dimension_numbers<[1], [0], [0], [1], [0, 0, 1, 1], [], []>} : vector<8x192xbf16>, vector<192x32xbf16>, vector<8x32xf32> -> vector<8x32xf32>
    %8 = arith.addf %5, %7 : vector<8x32xf32>
    %c0_6 = arith.constant 0 : index
    %c0_7 = arith.constant 0 : index
    %9 = vector.load %arg7[%c0_6, %c0_7] : memref<8x32xf32, #tpu.memory_space<vmem>>, vector<8x32xf32>
    tpu.vector_store %arg7[%c0_6, %c0_7], %8 {strides = array<i32>} : memref<8x32xf32, #tpu.memory_space<vmem>>, vector<8x32xf32>,
    %c0_i32_8 = arith.constant 0 : i32
    %10 = arith.cmpi eq, %arg2, %c0_i32_8 : i32
    %11 = arith.extui %10 : i1 to i32
    %c0_i32_9 = arith.constant 0 : i32
    %12 = arith.cmpi ne, %11, %c0_i32_9 : i32
    scf.if %12 {
      %c0_10 = arith.constant 0 : index
      %c0_11 = arith.constant 0 : index
      %13 = vector.load %arg7[%c0_10, %c0_11] : memref<8x32xf32, #tpu.memory_space<vmem>>, vector<8x32xf32>
      %c0_12 = arith.constant 0 : index
      %c0_13 = arith.constant 0 : index
      %14 = vector.load %arg5[%c0_12, %c0_13] : memref<1x32xf32, #tpu.memory_space<vmem>>, vector<1x32xf32>
      %15 = vector.broadcast %14 : vector<1x32xf32> to vector<8x32xf32>
      %16 = arith.addf %13, %15 : vector<8x32xf32>
      %c0_14 = arith.constant 0 : index
      %c0_15 = arith.constant 0 : index
      %17 = vector.load %arg6[%c0_14, %c0_15] : memref<8x32xf32, #tpu.memory_space<vmem>>, vector<8x32xf32>
      tpu.vector_store %arg6[%c0_14, %c0_15], %16 {strides = array<i32>} : memref<8x32xf32, #tpu.memory_space<vmem>>, vector<8x32xf32>,
    } else {
    }
    return
  }
  func.func @transform_0(%arg0: i32, %arg1: i32, %arg2: i32) -> (i32, i32) {
    %c0_i32 = arith.constant 0 : i32
    return %arg0, %arg2 : i32, i32
  }
  func.func @transform_1(%arg0: i32, %arg1: i32, %arg2: i32) -> (i32, i32) {
    %c0_i32 = arith.constant 0 : i32
    return %arg2, %arg1 : i32, i32
  }
  func.func @transform_2(%arg0: i32, %arg1: i32, %arg2: i32) -> (i32, i32) {
    %c0_i32 = arith.constant 0 : i32
    %c0_i32_0 = arith.constant 0 : i32
    return %c0_i32, %arg1 : i32, i32
  }
  func.func @transform_3(%arg0: i32, %arg1: i32, %arg2: i32) -> (i32, i32) {
    %c0_i32 = arith.constant 0 : i32
    return %arg0, %arg1 : i32, i32
  }
}

module attributes {stable_mosaic.version = 11 : i64} {
  func.func @_layernorm_kernel(%arg0: i32, %arg1: memref<16x32xf32, #tpu.memory_space<vmem>>, %arg2: memref<1x32xf32, #tpu.memory_space<vmem>>, %arg3: memref<1x32xf32, #tpu.memory_space<vmem>>, %arg4: memref<16x32xf32, #tpu.memory_space<vmem>>) attributes {dimension_semantics = [#tpu.dimension_semantics<parallel>], iteration_bounds = array<i64: 1>, scalar_prefetch = 0 : i64, scratch_operands = 0 : i64, tpu.core_type = #tpu.core_type<tc>, window_params = [{transform_indices = @transform_0, window_bounds = array<i64: 16, 32>}, {pipeline_mode = #tpu.pipeline_mode<synchronous>, transform_indices = @transform_1, window_bounds = array<i64: 1, 32>}, {pipeline_mode = #tpu.pipeline_mode<synchronous>, transform_indices = @transform_2, window_bounds = array<i64: 1, 32>}, {transform_indices = @transform_3, window_bounds = array<i64: 16, 32>}]} {
    %c0 = arith.constant 0 : index
    %c0_0 = arith.constant 0 : index
    %0 = vector.load %arg1[%c0, %c0_0] : memref<16x32xf32, #tpu.memory_space<vmem>>, vector<16x32xf32>
    %cst = arith.constant dense<0.000000e+00> : vector<16xf32>
    %1 = vector.multi_reduction <add>, %0, %cst [1] : vector<16x32xf32> to vector<16xf32>
    %2 = vector.shape_cast %1 : vector<16xf32> to vector<16x1xf32>
    %cst_1 = arith.constant 3.200000e+01 : f32
    %3 = vector.broadcast %cst_1 : f32 to vector<16x1xf32>
    %4 = arith.divf %2, %3 : vector<16x1xf32>
    %5 = vector.broadcast %4 : vector<16x1xf32> to vector<16x32xf32>
    %6 = arith.subf %0, %5 : vector<16x32xf32>
    %7 = arith.mulf %6, %6 : vector<16x32xf32>
    %cst_2 = arith.constant dense<0.000000e+00> : vector<16xf32>
    %8 = vector.multi_reduction <add>, %7, %cst_2 [1] : vector<16x32xf32> to vector<16xf32>
    %9 = vector.shape_cast %8 : vector<16xf32> to vector<16x1xf32>
    %cst_3 = arith.constant 3.200000e+01 : f32
    %10 = vector.broadcast %cst_3 : f32 to vector<16x1xf32>
    %11 = arith.divf %9, %10 : vector<16x1xf32>
    %12 = vector.broadcast %4 : vector<16x1xf32> to vector<16x32xf32>
    %13 = arith.subf %0, %12 : vector<16x32xf32>
    %cst_4 = arith.constant 9.99999974E-6 : f32
    %14 = vector.broadcast %cst_4 : f32 to vector<16x1xf32>
    %15 = arith.addf %11, %14 : vector<16x1xf32>
    %16 = math.rsqrt %15 : vector<16x1xf32>
    %17 = vector.broadcast %16 : vector<16x1xf32> to vector<16x32xf32>
    %18 = arith.mulf %13, %17 : vector<16x32xf32>
    %c0_5 = arith.constant 0 : index
    %c0_6 = arith.constant 0 : index
    %19 = vector.load %arg2[%c0_5, %c0_6] : memref<1x32xf32, #tpu.memory_space<vmem>>, vector<1x32xf32>
    %20 = vector.broadcast %19 : vector<1x32xf32> to vector<16x32xf32>
    %21 = arith.mulf %18, %20 : vector<16x32xf32>
    %c0_7 = arith.constant 0 : index
    %c0_8 = arith.constant 0 : index
    %22 = vector.load %arg3[%c0_7, %c0_8] : memref<1x32xf32, #tpu.memory_space<vmem>>, vector<1x32xf32>
    %23 = vector.broadcast %22 : vector<1x32xf32> to vector<16x32xf32>
    %24 = arith.addf %21, %23 : vector<16x32xf32>
    %c0_9 = arith.constant 0 : index
    %c0_10 = arith.constant 0 : index
    %25 = vector.load %arg4[%c0_9, %c0_10] : memref<16x32xf32, #tpu.memory_space<vmem>>, vector<16x32xf32>
    tpu.vector_store %arg4[%c0_9, %c0_10], %24 {strides = array<i32>} : memref<16x32xf32, #tpu.memory_space<vmem>>, vector<16x32xf32>,
    return
  }
  func.func @transform_0(%arg0: i32) -> (i32, i32) {
    %c0_i32 = arith.constant 0 : i32
    %c0_i32_0 = arith.constant 0 : i32
    return %arg0, %c0_i32 : i32, i32
  }
  func.func @transform_1(%arg0: i32) -> (i32, i32) {
    %c0_i32 = arith.constant 0 : i32
    %c0_i32_0 = arith.constant 0 : i32
    %c0_i32_1 = arith.constant 0 : i32
    return %c0_i32, %c0_i32_0 : i32, i32
  }
  func.func @transform_2(%arg0: i32) -> (i32, i32) {
    %c0_i32 = arith.constant 0 : i32
    %c0_i32_0 = arith.constant 0 : i32
    %c0_i32_1 = arith.constant 0 : i32
    return %c0_i32, %c0_i32_0 : i32, i32
  }
  func.func @transform_3(%arg0: i32) -> (i32, i32) {
    %c0_i32 = arith.constant 0 : i32
    %c0_i32_0 = arith.constant 0 : i32
    return %arg0, %c0_i32 : i32, i32
  }
}

module attributes {stable_mosaic.version = 11 : i64} {
  func.func @_fused_linear_kernel(%arg0: i32, %arg1: i32, %arg2: i32, %arg3: memref<16x32xf32, #tpu.memory_space<vmem>>, %arg4: memref<32x96xbf16, #tpu.memory_space<vmem>>, %arg5: memref<1x96xf32, #tpu.memory_space<vmem>>, %arg6: memref<1x32xf32, #tpu.memory_space<vmem>>, %arg7: memref<1x32xf32, #tpu.memory_space<vmem>>, %arg8: memref<16x96xbf16, #tpu.memory_space<vmem>>, %arg9: memref<16x96xf32, #tpu.memory_space<vmem>>) attributes {dimension_semantics = [#tpu.dimension_semantics<parallel>, #tpu.dimension_semantics<parallel>, #tpu.dimension_semantics<arbitrary>], iteration_bounds = array<i64: 1, 1, 1>, scalar_prefetch = 0 : i64, scratch_operands = 1 : i64, tpu.core_type = #tpu.core_type<tc>, window_params = [{transform_indices = @transform_0, window_bounds = array<i64: 16, 32>}, {transform_indices = @transform_1, window_bounds = array<i64: 32, 96>}, {transform_indices = @transform_2, window_bounds = array<i64: 1, 96>}, {pipeline_mode = #tpu.pipeline_mode<synchronous>, transform_indices = @transform_3, window_bounds = array<i64: 1, 32>}, {pipeline_mode = #tpu.pipeline_mode<synchronous>, transform_indices = @transform_4, window_bounds = array<i64: 1, 32>}, {transform_indices = @transform_5, window_bounds = array<i64: 16, 96>}]} {
    %c0_i32 = arith.constant 0 : i32
    %0 = arith.cmpi eq, %arg2, %c0_i32 : i32
    %1 = arith.extui %0 : i1 to i32
    %c0_i32_0 = arith.constant 0 : i32
    %2 = arith.cmpi ne, %1, %c0_i32_0 : i32
    scf.if %2 {
      %cst_19 = arith.constant 0.000000e+00 : f32
      %37 = vector.broadcast %cst_19 : f32 to vector<16x96xf32>
      %c0_20 = arith.constant 0 : index
      %c0_21 = arith.constant 0 : index
      %38 = vector.load %arg9[%c0_20, %c0_21] : memref<16x96xf32, #tpu.memory_space<vmem>>, vector<16x96xf32>
      tpu.vector_store %arg9[%c0_20, %c0_21], %37 {strides = array<i32>} : memref<16x96xf32, #tpu.memory_space<vmem>>, vector<16x96xf32>,
    } else {
    }
    %c0 = arith.constant 0 : index
    %c0_1 = arith.constant 0 : index
    %3 = vector.load %arg3[%c0, %c0_1] : memref<16x32xf32, #tpu.memory_space<vmem>>, vector<16x32xf32>
    %cst = arith.constant dense<0.000000e+00> : vector<16xf32>
    %4 = vector.multi_reduction <add>, %3, %cst [1] : vector<16x32xf32> to vector<16xf32>
    %5 = vector.shape_cast %4 : vector<16xf32> to vector<16x1xf32>
    %cst_2 = arith.constant 3.200000e+01 : f32
    %6 = vector.broadcast %cst_2 : f32 to vector<16x1xf32>
    %7 = arith.divf %5, %6 : vector<16x1xf32>
    %8 = vector.broadcast %7 : vector<16x1xf32> to vector<16x32xf32>
    %9 = arith.subf %3, %8 : vector<16x32xf32>
    %10 = arith.mulf %9, %9 : vector<16x32xf32>
    %cst_3 = arith.constant dense<0.000000e+00> : vector<16xf32>
    %11 = vector.multi_reduction <add>, %10, %cst_3 [1] : vector<16x32xf32> to vector<16xf32>
    %12 = vector.shape_cast %11 : vector<16xf32> to vector<16x1xf32>
    %cst_4 = arith.constant 3.200000e+01 : f32
    %13 = vector.broadcast %cst_4 : f32 to vector<16x1xf32>
    %14 = arith.divf %12, %13 : vector<16x1xf32>
    %15 = vector.broadcast %7 : vector<16x1xf32> to vector<16x32xf32>
    %16 = arith.subf %3, %15 : vector<16x32xf32>
    %cst_5 = arith.constant 9.99999974E-6 : f32
    %17 = vector.broadcast %cst_5 : f32 to vector<16x1xf32>
    %18 = arith.addf %14, %17 : vector<16x1xf32>
    %19 = math.rsqrt %18 : vector<16x1xf32>
    %20 = vector.broadcast %19 : vector<16x1xf32> to vector<16x32xf32>
    %21 = arith.mulf %16, %20 : vector<16x32xf32>
    %c0_6 = arith.constant 0 : index
    %c0_7 = arith.constant 0 : index
    %22 = vector.load %arg6[%c0_6, %c0_7] : memref<1x32xf32, #tpu.memory_space<vmem>>, vector<1x32xf32>
    %23 = vector.broadcast %22 : vector<1x32xf32> to vector<16x32xf32>
    %24 = arith.mulf %21, %23 : vector<16x32xf32>
    %c0_8 = arith.constant 0 : index
    %c0_9 = arith.constant 0 : index
    %25 = vector.load %arg7[%c0_8, %c0_9] : memref<1x32xf32, #tpu.memory_space<vmem>>, vector<1x32xf32>
    %26 = vector.broadcast %25 : vector<1x32xf32> to vector<16x32xf32>
    %27 = arith.addf %24, %26 : vector<16x32xf32>
    %28 = arith.truncf %27 : vector<16x32xf32> to vector<16x32xbf16>
    %c0_10 = arith.constant 0 : index
    %c0_11 = arith.constant 0 : index
    %29 = vector.load %arg9[%c0_10, %c0_11] : memref<16x96xf32, #tpu.memory_space<vmem>>, vector<16x96xf32>
    %c0_12 = arith.constant 0 : index
    %c0_13 = arith.constant 0 : index
    %30 = vector.load %arg4[%c0_12, %c0_13] : memref<32x96xbf16, #tpu.memory_space<vmem>>, vector<32x96xbf16>
    %cst_14 = arith.constant dense<0.000000e+00> : vector<16x96xf32>
    %31 = tpu.matmul %28, %30, %cst_14 {dimension_numbers = #tpu.dot_dimension_numbers<[1], [0], [0], [1], [0, 0, 1, 1], [], []>} : vector<16x32xbf16>, vector<32x96xbf16>, vector<16x96xf32> -> vector<16x96xf32>
    %32 = arith.addf %29, %31 : vector<16x96xf32>
    %c0_15 = arith.constant 0 : index
    %c0_16 = arith.constant 0 : index
    %33 = vector.load %arg9[%c0_15, %c0_16] : memref<16x96xf32, #tpu.memory_space<vmem>>, vector<16x96xf32>
    tpu.vector_store %arg9[%c0_15, %c0_16], %32 {strides = array<i32>} : memref<16x96xf32, #tpu.memory_space<vmem>>, vector<16x96xf32>,
    %c0_i32_17 = arith.constant 0 : i32
    %34 = arith.cmpi eq, %arg2, %c0_i32_17 : i32
    %35 = arith.extui %34 : i1 to i32
    %c0_i32_18 = arith.constant 0 : i32
    %36 = arith.cmpi ne, %35, %c0_i32_18 : i32
    scf.if %36 {
      %c0_19 = arith.constant 0 : index
      %c0_20 = arith.constant 0 : index
      %37 = vector.load %arg9[%c0_19, %c0_20] : memref<16x96xf32, #tpu.memory_space<vmem>>, vector<16x96xf32>
      %c0_21 = arith.constant 0 : index
      %c0_22 = arith.constant 0 : index
      %38 = vector.load %arg5[%c0_21, %c0_22] : memref<1x96xf32, #tpu.memory_space<vmem>>, vector<1x96xf32>
      %39 = vector.broadcast %38 : vector<1x96xf32> to vector<16x96xf32>
      %40 = arith.addf %37, %39 : vector<16x96xf32>
      %41 = arith.truncf %40 : vector<16x96xf32> to vector<16x96xbf16>
      %c0_23 = arith.constant 0 : index
      %c0_24 = arith.constant 0 : index
      %42 = vector.load %arg8[%c0_23, %c0_24] : memref<16x96xbf16, #tpu.memory_space<vmem>>, vector<16x96xbf16>
      tpu.vector_store %arg8[%c0_23, %c0_24], %41 {strides = array<i32>} : memref<16x96xbf16, #tpu.memory_space<vmem>>, vector<16x96xbf16>,
    } else {
    }
    return
  }
  func.func @transform_0(%arg0: i32, %arg1: i32, %arg2: i32) -> (i32, i32) {
    %c0_i32 = arith.constant 0 : i32
    return %arg0, %arg2 : i32, i32
  }
  func.func @transform_1(%arg0: i32, %arg1: i32, %arg2: i32) -> (i32, i32) {
    %c0_i32 = arith.constant 0 : i32
    return %arg2, %arg1 : i32, i32
  }
  func.func @transform_2(%arg0: i32, %arg1: i32, %arg2: i32) -> (i32, i32) {
    %c0_i32 = arith.constant 0 : i32
    %c0_i32_0 = arith.constant 0 : i32
    return %c0_i32, %arg1 : i32, i32
  }
  func.func @transform_3(%arg0: i32, %arg1: i32, %arg2: i32) -> (i32, i32) {
    %c0_i32 = arith.constant 0 : i32
    %c0_i32_0 = arith.constant 0 : i32
    %c0_i32_1 = arith.constant 0 : i32
    return %c0_i32, %c0_i32_0 : i32, i32
  }
  func.func @transform_4(%arg0: i32, %arg1: i32, %arg2: i32) -> (i32, i32) {
    %c0_i32 = arith.constant 0 : i32
    %c0_i32_0 = arith.constant 0 : i32
    %c0_i32_1 = arith.constant 0 : i32
    return %c0_i32, %c0_i32_0 : i32, i32
  }
  func.func @transform_5(%arg0: i32, %arg1: i32, %arg2: i32) -> (i32, i32) {
    %c0_i32 = arith.constant 0 : i32
    return %arg0, %arg1 : i32, i32
  }
}

module attributes {stable_mosaic.version = 11 : i64} {
  func.func @_attention_kernel(%arg0: i32, %arg1: i32, %arg2: memref<1x5x32xbf16, #tpu.memory_space<vmem>>, %arg3: memref<1x5x32xbf16, #tpu.memory_space<vmem>>, %arg4: memref<1x5x32xbf16, #tpu.memory_space<vmem>>, %arg5: memref<1x5x32xbf16, #tpu.memory_space<vmem>>) attributes {dimension_semantics = [#tpu.dimension_semantics<parallel>, #tpu.dimension_semantics<parallel>], iteration_bounds = array<i64: 2, 1>, scalar_prefetch = 0 : i64, scratch_operands = 0 : i64, tpu.core_type = #tpu.core_type<tc>, window_params = [{transform_indices = @transform_0, window_bounds = array<i64: 1, 5, 32>}, {transform_indices = @transform_1, window_bounds = array<i64: 1, 5, 32>}, {transform_indices = @transform_2, window_bounds = array<i64: 1, 5, 32>}, {transform_indices = @transform_3, window_bounds = array<i64: 1, 5, 32>}]} {
    %c0 = arith.constant 0 : index
    %c0_0 = arith.constant 0 : index
    %c0_1 = arith.constant 0 : index
    %0 = vector.load %arg2[%c0, %c0_0, %c0_1] : memref<1x5x32xbf16, #tpu.memory_space<vmem>>, vector<1x5x16xbf16>
    %1 = vector.shape_cast %0 : vector<1x5x16xbf16> to vector<5x16xbf16>
    %2 = arith.extf %1 : vector<5x16xbf16> to vector<5x16xf32>
    %cst = arith.constant 2.500000e-01 : f32
    %3 = vector.broadcast %cst : f32 to vector<5x16xf32>
    %4 = arith.mulf %2, %3 : vector<5x16xf32>
    %5 = arith.truncf %4 : vector<5x16xf32> to vector<5x16xbf16>
    %c0_2 = arith.constant 0 : index
    %c0_3 = arith.constant 0 : index
    %c0_4 = arith.constant 0 : index
    %6 = vector.load %arg3[%c0_2, %c0_3, %c0_4] : memref<1x5x32xbf16, #tpu.memory_space<vmem>>, vector<1x5x16xbf16>
    %7 = vector.shape_cast %6 : vector<1x5x16xbf16> to vector<5x16xbf16>
    %c0_5 = arith.constant 0 : index
    %c0_6 = arith.constant 0 : index
    %c0_7 = arith.constant 0 : index
    %8 = vector.load %arg4[%c0_5, %c0_6, %c0_7] : memref<1x5x32xbf16, #tpu.memory_space<vmem>>, vector<1x5x16xbf16>
    %9 = vector.shape_cast %8 : vector<1x5x16xbf16> to vector<5x16xbf16>
    %cst_8 = arith.constant dense<0.000000e+00> : vector<5x5xf32>
    %10 = tpu.matmul %5, %7, %cst_8 {dimension_numbers = #tpu.dot_dimension_numbers<[1], [1], [0], [0], [0, 0, 1, 0], [], []>} : vector<5x16xbf16>, vector<5x16xbf16>, vector<5x5xf32> -> vector<5x5xf32>
    %cst_9 = arith.constant dense<0xFF800000> : vector<5xf32>
    %11 = vector.multi_reduction <maximumf>, %10, %cst_9 [1] : vector<5x5xf32> to vector<5xf32>
    %12 = vector.shape_cast %11 : vector<5xf32> to vector<5x1xf32>
    %13 = vector.broadcast %12 : vector<5x1xf32> to vector<5x5xf32>
    %14 = arith.subf %10, %13 : vector<5x5xf32>
    %15 = math.exp %14 : vector<5x5xf32>
    %cst_10 = arith.constant dense<0.000000e+00> : vector<5xf32>
    %16 = vector.multi_reduction <add>, %15, %cst_10 [1] : vector<5x5xf32> to vector<5xf32>
    %17 = vector.shape_cast %16 : vector<5xf32> to vector<5x1xf32>
    %18 = arith.truncf %15 : vector<5x5xf32> to vector<5x5xbf16>
    %cst_11 = arith.constant dense<0.000000e+00> : vector<5x16xf32>
    %19 = tpu.matmul %18, %9, %cst_11 {dimension_numbers = #tpu.dot_dimension_numbers<[1], [0], [0], [1], [0, 0, 1, 1], [], []>} : vector<5x5xbf16>, vector<5x16xbf16>, vector<5x16xf32> -> vector<5x16xf32>
    %20 = tpu.reciprocal %17 {approx = true} : vector<5x1xf32> -> vector<5x1xf32>
    %21 = vector.broadcast %20 : vector<5x1xf32> to vector<5x16xf32>
    %22 = arith.mulf %19, %21 : vector<5x16xf32>
    %c0_12 = arith.constant 0 : index
    %c0_13 = arith.constant 0 : index
    %c16 = arith.constant 16 : index
    %23 = vector.load %arg2[%c0_12, %c0_13, %c16] : memref<1x5x32xbf16, #tpu.memory_space<vmem>>, vector<1x5x16xbf16>
    %24 = vector.shape_cast %23 : vector<1x5x16xbf16> to vector<5x16xbf16>
    %25 = arith.extf %24 : vector<5x16xbf16> to vector<5x16xf32>
    %cst_14 = arith.constant 2.500000e-01 : f32
    %26 = vector.broadcast %cst_14 : f32 to vector<5x16xf32>
    %27 = arith.mulf %25, %26 : vector<5x16xf32>
    %28 = arith.truncf %27 : vector<5x16xf32> to vector<5x16xbf16>
    %c0_15 = arith.constant 0 : index
    %c0_16 = arith.constant 0 : index
    %c16_17 = arith.constant 16 : index
    %29 = vector.load %arg3[%c0_15, %c0_16, %c16_17] : memref<1x5x32xbf16, #tpu.memory_space<vmem>>, vector<1x5x16xbf16>
    %30 = vector.shape_cast %29 : vector<1x5x16xbf16> to vector<5x16xbf16>
    %c0_18 = arith.constant 0 : index
    %c0_19 = arith.constant 0 : index
    %c16_20 = arith.constant 16 : index
    %31 = vector.load %arg4[%c0_18, %c0_19, %c16_20] : memref<1x5x32xbf16, #tpu.memory_space<vmem>>, vector<1x5x16xbf16>
    %32 = vector.shape_cast %31 : vector<1x5x16xbf16> to vector<5x16xbf16>
    %cst_21 = arith.constant dense<0.000000e+00> : vector<5x5xf32>
    %33 = tpu.matmul %28, %30, %cst_21 {dimension_numbers = #tpu.dot_dimension_numbers<[1], [1], [0], [0], [0, 0, 1, 0], [], []>} : vector<5x16xbf16>, vector<5x16xbf16>, vector<5x5xf32> -> vector<5x5xf32>
    %cst_22 = arith.constant dense<0xFF800000> : vector<5xf32>
    %34 = vector.multi_reduction <maximumf>, %33, %cst_22 [1] : vector<5x5xf32> to vector<5xf32>
    %35 = vector.shape_cast %34 : vector<5xf32> to vector<5x1xf32>
    %36 = vector.broadcast %35 : vector<5x1xf32> to vector<5x5xf32>
    %37 = arith.subf %33, %36 : vector<5x5xf32>
    %38 = math.exp %37 : vector<5x5xf32>
    %cst_23 = arith.constant dense<0.000000e+00> : vector<5xf32>
    %39 = vector.multi_reduction <add>, %38, %cst_23 [1] : vector<5x5xf32> to vector<5xf32>
    %40 = vector.shape_cast %39 : vector<5xf32> to vector<5x1xf32>
    %41 = arith.truncf %38 : vector<5x5xf32> to vector<5x5xbf16>
    %cst_24 = arith.constant dense<0.000000e+00> : vector<5x16xf32>
    %42 = tpu.matmul %41, %32, %cst_24 {dimension_numbers = #tpu.dot_dimension_numbers<[1], [0], [0], [1], [0, 0, 1, 1], [], []>} : vector<5x5xbf16>, vector<5x16xbf16>, vector<5x16xf32> -> vector<5x16xf32>
    %43 = tpu.reciprocal %40 {approx = true} : vector<5x1xf32> -> vector<5x1xf32>
    %44 = vector.broadcast %43 : vector<5x1xf32> to vector<5x16xf32>
    %45 = arith.mulf %42, %44 : vector<5x16xf32>
    %46 = tpu.concatenate %22, %45 in 1 : vector<5x16xf32>, vector<5x16xf32> -> vector<5x32xf32>
    %47 = arith.truncf %46 : vector<5x32xf32> to vector<5x32xbf16>
    %c0_25 = arith.constant 0 : index
    %c0_26 = arith.constant 0 : index
    %c0_27 = arith.constant 0 : index
    %48 = vector.load %arg5[%c0_25, %c0_26, %c0_27] : memref<1x5x32xbf16, #tpu.memory_space<vmem>>, vector<1x5x32xbf16>
    %49 = vector.shape_cast %48 : vector<1x5x32xbf16> to vector<5x32xbf16>
    %50 = vector.shape_cast %47 : vector<5x32xbf16> to vector<1x5x32xbf16>
    tpu.vector_store %arg5[%c0_25, %c0_26, %c0_27], %50 {strides = array<i32>} : memref<1x5x32xbf16, #tpu.memory_space<vmem>>, vector<1x5x32xbf16>,
    return
  }
  func.func @transform_0(%arg0: i32, %arg1: i32) -> (i32, i32, i32) {
    %c0_i32 = arith.constant 0 : i32
    %c0_i32_0 = arith.constant 0 : i32
    return %arg0, %c0_i32, %arg1 : i32, i32, i32
  }
  func.func @transform_1(%arg0: i32, %arg1: i32) -> (i32, i32, i32) {
    %c0_i32 = arith.constant 0 : i32
    %c0_i32_0 = arith.constant 0 : i32
    return %arg0, %c0_i32, %arg1 : i32, i32, i32
  }
  func.func @transform_2(%arg0: i32, %arg1: i32) -> (i32, i32, i32) {
    %c0_i32 = arith.constant 0 : i32
    %c0_i32_0 = arith.constant 0 : i32
    return %arg0, %c0_i32, %arg1 : i32, i32, i32
  }
  func.func @transform_3(%arg0: i32, %arg1: i32) -> (i32, i32, i32) {
    %c0_i32 = arith.constant 0 : i32
    %c0_i32_0 = arith.constant 0 : i32
    return %arg0, %c0_i32, %arg1 : i32, i32, i32
  }
}

module attributes {stable_mosaic.version = 11 : i64} {
  func.func @_fused_linear_kernel(%arg0: i32, %arg1: i32, %arg2: i32, %arg3: memref<16x32xbf16, #tpu.memory_space<vmem>>, %arg4: memref<32x32xbf16, #tpu.memory_space<vmem>>, %arg5: memref<1x32xf32, #tpu.memory_space<vmem>>, %arg6: memref<16x32xf32, #tpu.memory_space<vmem>>, %arg7: memref<16x32xf32, #tpu.memory_space<vmem>>, %arg8: memref<16x32xf32, #tpu.memory_space<vmem>>) attributes {dimension_semantics = [#tpu.dimension_semantics<parallel>, #tpu.dimension_semantics<parallel>, #tpu.dimension_semantics<arbitrary>], iteration_bounds = array<i64: 1, 1, 1>, scalar_prefetch = 0 : i64, scratch_operands = 1 : i64, tpu.core_type = #tpu.core_type<tc>, window_params = [{transform_indices = @transform_0, window_bounds = array<i64: 16, 32>}, {transform_indices = @transform_1, window_bounds = array<i64: 32, 32>}, {transform_indices = @transform_2, window_bounds = array<i64: 1, 32>}, {transform_indices = @transform_3, window_bounds = array<i64: 16, 32>}, {transform_indices = @transform_4, window_bounds = array<i64: 16, 32>}]} {
    %c0_i32 = arith.constant 0 : i32
    %0 = arith.cmpi eq, %arg2, %c0_i32 : i32
    %1 = arith.extui %0 : i1 to i32
    %c0_i32_0 = arith.constant 0 : i32
    %2 = arith.cmpi ne, %1, %c0_i32_0 : i32
    scf.if %2 {
      %cst_10 = arith.constant 0.000000e+00 : f32
      %12 = vector.broadcast %cst_10 : f32 to vector<16x32xf32>
      %c0_11 = arith.constant 0 : index
      %c0_12 = arith.constant 0 : index
      %13 = vector.load %arg8[%c0_11, %c0_12] : memref<16x32xf32, #tpu.memory_space<vmem>>, vector<16x32xf32>
      tpu.vector_store %arg8[%c0_11, %c0_12], %12 {strides = array<i32>} : memref<16x32xf32, #tpu.memory_space<vmem>>, vector<16x32xf32>,
    } else {
    }
    %c0 = arith.constant 0 : index
    %c0_1 = arith.constant 0 : index
    %3 = vector.load %arg3[%c0, %c0_1] : memref<16x32xbf16, #tpu.memory_space<vmem>>, vector<16x32xbf16>
    %c0_2 = arith.constant 0 : index
    %c0_3 = arith.constant 0 : index
    %4 = vector.load %arg8[%c0_2, %c0_3] : memref<16x32xf32, #tpu.memory_space<vmem>>, vector<16x32xf32>
    %c0_4 = arith.constant 0 : index
    %c0_5 = arith.constant 0 : index
    %5 = vector.load %arg4[%c0_4, %c0_5] : memref<32x32xbf16, #tpu.memory_space<vmem>>, vector<32x32xbf16>
    %cst = arith.constant dense<0.000000e+00> : vector<16x32xf32>
    %6 = tpu.matmul %3, %5, %cst {dimension_numbers = #tpu.dot_dimension_numbers<[1], [0], [0], [1], [0, 0, 1, 1], [], []>} : vector<16x32xbf16>, vector<32x32xbf16>, vector<16x32xf32> -> vector<16x32xf32>
    %7 = arith.addf %4, %6 : vector<16x32xf32>
    %c0_6 = arith.constant 0 : index
    %c0_7 = arith.constant 0 : index
    %8 = vector.load %arg8[%c0_6, %c0_7] : memref<16x32xf32, #tpu.memory_space<vmem>>, vector<16x32xf32>
    tpu.vector_store %arg8[%c0_6, %c0_7], %7 {strides = array<i32>} : memref<16x32xf32, #tpu.memory_space<vmem>>, vector<16x32xf32>,
    %c0_i32_8 = arith.constant 0 : i32
    %9 = arith.cmpi eq, %arg2, %c0_i32_8 : i32
    %10 = arith.extui %9 : i1 to i32
    %c0_i32_9 = arith.constant 0 : i32
    %11 = arith.cmpi ne, %10, %c0_i32_9 : i32
    scf.if %11 {
      %c0_10 = arith.constant 0 : index
      %c0_11 = arith.constant 0 : index
      %12 = vector.load %arg8[%c0_10, %c0_11] : memref<16x32xf32, #tpu.memory_space<vmem>>, vector<16x32xf32>
      %c0_12 = arith.constant 0 : index
      %c0_13 = arith.constant 0 : index
      %13 = vector.load %arg5[%c0_12, %c0_13] : memref<1x32xf32, #tpu.memory_space<vmem>>, vector<1x32xf32>
      %14 = vector.broadcast %13 : vector<1x32xf32> to vector<16x32xf32>
      %15 = arith.addf %12, %14 : vector<16x32xf32>
      %c0_14 = arith.constant 0 : index
      %c0_15 = arith.constant 0 : index
      %16 = vector.load %arg6[%c0_14, %c0_15] : memref<16x32xf32, #tpu.memory_space<vmem>>, vector<16x32xf32>
      %17 = arith.addf %15, %16 : vector<16x32xf32>
      %c0_16 = arith.constant 0 : index
      %c0_17 = arith.constant 0 : index
      %18 = vector.load %arg7[%c0_16, %c0_17] : memref<16x32xf32, #tpu.memory_space<vmem>>, vector<16x32xf32>
      tpu.vector_store %arg7[%c0_16, %c0_17], %17 {strides = array<i32>} : memref<16x32xf32, #tpu.memory_space<vmem>>, vector<16x32xf32>,
    } else {
    }
    return
  }
  func.func @transform_0(%arg0: i32, %arg1: i32, %arg2: i32) -> (i32, i32) {
    %c0_i32 = arith.constant 0 : i32
    return %arg0, %arg2 : i32, i32
  }
  func.func @transform_1(%arg0: i32, %arg1: i32, %arg2: i32) -> (i32, i32) {
    %c0_i32 = arith.constant 0 : i32
    return %arg2, %arg1 : i32, i32
  }
  func.func @transform_2(%arg0: i32, %arg1: i32, %arg2: i32) -> (i32, i32) {
    %c0_i32 = arith.constant 0 : i32
    %c0_i32_0 = arith.constant 0 : i32
    return %c0_i32, %arg1 : i32, i32
  }
  func.func @transform_3(%arg0: i32, %arg1: i32, %arg2: i32) -> (i32, i32) {
    %c0_i32 = arith.constant 0 : i32
    return %arg0, %arg1 : i32, i32
  }
  func.func @transform_4(%arg0: i32, %arg1: i32, %arg2: i32) -> (i32, i32) {
    %c0_i32 = arith.constant 0 : i32
    return %arg0, %arg1 : i32, i32
  }
}

module attributes {stable_mosaic.version = 11 : i64} {
  func.func @_fused_linear_kernel(%arg0: i32, %arg1: i32, %arg2: i32, %arg3: memref<16x32xf32, #tpu.memory_space<vmem>>, %arg4: memref<32x128xbf16, #tpu.memory_space<vmem>>, %arg5: memref<1x128xf32, #tpu.memory_space<vmem>>, %arg6: memref<1x32xf32, #tpu.memory_space<vmem>>, %arg7: memref<1x32xf32, #tpu.memory_space<vmem>>, %arg8: memref<16x128xbf16, #tpu.memory_space<vmem>>, %arg9: memref<16x128xf32, #tpu.memory_space<vmem>>) attributes {dimension_semantics = [#tpu.dimension_semantics<parallel>, #tpu.dimension_semantics<parallel>, #tpu.dimension_semantics<arbitrary>], iteration_bounds = array<i64: 1, 1, 1>, scalar_prefetch = 0 : i64, scratch_operands = 1 : i64, tpu.core_type = #tpu.core_type<tc>, window_params = [{transform_indices = @transform_0, window_bounds = array<i64: 16, 32>}, {transform_indices = @transform_1, window_bounds = array<i64: 32, 128>}, {transform_indices = @transform_2, window_bounds = array<i64: 1, 128>}, {pipeline_mode = #tpu.pipeline_mode<synchronous>, transform_indices = @transform_3, window_bounds = array<i64: 1, 32>}, {pipeline_mode = #tpu.pipeline_mode<synchronous>, transform_indices = @transform_4, window_bounds = array<i64: 1, 32>}, {transform_indices = @transform_5, window_bounds = array<i64: 16, 128>}]} {
    %c0_i32 = arith.constant 0 : i32
    %0 = arith.cmpi eq, %arg2, %c0_i32 : i32
    %1 = arith.extui %0 : i1 to i32
    %c0_i32_0 = arith.constant 0 : i32
    %2 = arith.cmpi ne, %1, %c0_i32_0 : i32
    scf.if %2 {
      %cst_19 = arith.constant 0.000000e+00 : f32
      %37 = vector.broadcast %cst_19 : f32 to vector<16x128xf32>
      %c0_20 = arith.constant 0 : index
      %c0_21 = arith.constant 0 : index
      %38 = vector.load %arg9[%c0_20, %c0_21] : memref<16x128xf32, #tpu.memory_space<vmem>>, vector<16x128xf32>
      tpu.vector_store %arg9[%c0_20, %c0_21], %37 {strides = array<i32>} : memref<16x128xf32, #tpu.memory_space<vmem>>, vector<16x128xf32>,
    } else {
    }
    %c0 = arith.constant 0 : index
    %c0_1 = arith.constant 0 : index
    %3 = vector.load %arg3[%c0, %c0_1] : memref<16x32xf32, #tpu.memory_space<vmem>>, vector<16x32xf32>
    %cst = arith.constant dense<0.000000e+00> : vector<16xf32>
    %4 = vector.multi_reduction <add>, %3, %cst [1] : vector<16x32xf32> to vector<16xf32>
    %5 = vector.shape_cast %4 : vector<16xf32> to vector<16x1xf32>
    %cst_2 = arith.constant 3.200000e+01 : f32
    %6 = vector.broadcast %cst_2 : f32 to vector<16x1xf32>
    %7 = arith.divf %5, %6 : vector<16x1xf32>
    %8 = vector.broadcast %7 : vector<16x1xf32> to vector<16x32xf32>
    %9 = arith.subf %3, %8 : vector<16x32xf32>
    %10 = arith.mulf %9, %9 : vector<16x32xf32>
    %cst_3 = arith.constant dense<0.000000e+00> : vector<16xf32>
    %11 = vector.multi_reduction <add>, %10, %cst_3 [1] : vector<16x32xf32> to vector<16xf32>
    %12 = vector.shape_cast %11 : vector<16xf32> to vector<16x1xf32>
    %cst_4 = arith.constant 3.200000e+01 : f32
    %13 = vector.broadcast %cst_4 : f32 to vector<16x1xf32>
    %14 = arith.divf %12, %13 : vector<16x1xf32>
    %15 = vector.broadcast %7 : vector<16x1xf32> to vector<16x32xf32>
    %16 = arith.subf %3, %15 : vector<16x32xf32>
    %cst_5 = arith.constant 9.99999974E-6 : f32
    %17 = vector.broadcast %cst_5 : f32 to vector<16x1xf32>
    %18 = arith.addf %14, %17 : vector<16x1xf32>
    %19 = math.rsqrt %18 : vector<16x1xf32>
    %20 = vector.broadcast %19 : vector<16x1xf32> to vector<16x32xf32>
    %21 = arith.mulf %16, %20 : vector<16x32xf32>
    %c0_6 = arith.constant 0 : index
    %c0_7 = arith.constant 0 : index
    %22 = vector.load %arg6[%c0_6, %c0_7] : memref<1x32xf32, #tpu.memory_space<vmem>>, vector<1x32xf32>
    %23 = vector.broadcast %22 : vector<1x32xf32> to vector<16x32xf32>
    %24 = arith.mulf %21, %23 : vector<16x32xf32>
    %c0_8 = arith.constant 0 : index
    %c0_9 = arith.constant 0 : index
    %25 = vector.load %arg7[%c0_8, %c0_9] : memref<1x32xf32, #tpu.memory_space<vmem>>, vector<1x32xf32>
    %26 = vector.broadcast %25 : vector<1x32xf32> to vector<16x32xf32>
    %27 = arith.addf %24, %26 : vector<16x32xf32>
    %28 = arith.truncf %27 : vector<16x32xf32> to vector<16x32xbf16>
    %c0_10 = arith.constant 0 : index
    %c0_11 = arith.constant 0 : index
    %29 = vector.load %arg9[%c0_10, %c0_11] : memref<16x128xf32, #tpu.memory_space<vmem>>, vector<16x128xf32>
    %c0_12 = arith.constant 0 : index
    %c0_13 = arith.constant 0 : index
    %30 = vector.load %arg4[%c0_12, %c0_13] : memref<32x128xbf16, #tpu.memory_space<vmem>>, vector<32x128xbf16>
    %cst_14 = arith.constant dense<0.000000e+00> : vector<16x128xf32>
    %31 = tpu.matmul %28, %30, %cst_14 {dimension_numbers = #tpu.dot_dimension_numbers<[1], [0], [0], [1], [0, 0, 1, 1], [], []>} : vector<16x32xbf16>, vector<32x128xbf16>, vector<16x128xf32> -> vector<16x128xf32>
    %32 = arith.addf %29, %31 : vector<16x128xf32>
    %c0_15 = arith.constant 0 : index
    %c0_16 = arith.constant 0 : index
    %33 = vector.load %arg9[%c0_15, %c0_16] : memref<16x128xf32, #tpu.memory_space<vmem>>, vector<16x128xf32>
    tpu.vector_store %arg9[%c0_15, %c0_16], %32 {strides = array<i32>} : memref<16x128xf32, #tpu.memory_space<vmem>>, vector<16x128xf32>,
    %c0_i32_17 = arith.constant 0 : i32
    %34 = arith.cmpi eq, %arg2, %c0_i32_17 : i32
    %35 = arith.extui %34 : i1 to i32
    %c0_i32_18 = arith.constant 0 : i32
    %36 = arith.cmpi ne, %35, %c0_i32_18 : i32
    scf.if %36 {
      %c0_19 = arith.constant 0 : index
      %c0_20 = arith.constant 0 : index
      %37 = vector.load %arg9[%c0_19, %c0_20] : memref<16x128xf32, #tpu.memory_space<vmem>>, vector<16x128xf32>
      %c0_21 = arith.constant 0 : index
      %c0_22 = arith.constant 0 : index
      %38 = vector.load %arg5[%c0_21, %c0_22] : memref<1x128xf32, #tpu.memory_space<vmem>>, vector<1x128xf32>
      %39 = vector.broadcast %38 : vector<1x128xf32> to vector<16x128xf32>
      %40 = arith.addf %37, %39 : vector<16x128xf32>
      %cst_23 = arith.constant 1.702000e+00 : f32
      %41 = vector.broadcast %cst_23 : f32 to vector<16x128xf32>
      %42 = arith.mulf %41, %40 : vector<16x128xf32>
      %43 = arith.negf %42 : vector<16x128xf32>
      %44 = math.exp %43 : vector<16x128xf32>
      %cst_24 = arith.constant 1.000000e+00 : f32
      %45 = vector.broadcast %cst_24 : f32 to vector<16x128xf32>
      %46 = arith.addf %45, %44 : vector<16x128xf32>
      %47 = arith.divf %45, %46 : vector<16x128xf32>
      %48 = arith.mulf %40, %47 : vector<16x128xf32>
      %49 = arith.truncf %48 : vector<16x128xf32> to vector<16x128xbf16>
      %c0_25 = arith.constant 0 : index
      %c0_26 = arith.constant 0 : index
      %50 = vector.load %arg8[%c0_25, %c0_26] : memref<16x128xbf16, #tpu.memory_space<vmem>>, vector<16x128xbf16>
      tpu.vector_store %arg8[%c0_25, %c0_26], %49 {strides = array<i32>} : memref<16x128xbf16, #tpu.memory_space<vmem>>, vector<16x128xbf16>,
    } else {
    }
    return
  }
  func.func @transform_0(%arg0: i32, %arg1: i32, %arg2: i32) -> (i32, i32) {
    %c0_i32 = arith.constant 0 : i32
    return %arg0, %arg2 : i32, i32
  }
  func.func @transform_1(%arg0: i32, %arg1: i32, %arg2: i32) -> (i32, i32) {
    %c0_i32 = arith.constant 0 : i32
    return %arg2, %arg1 : i32, i32
  }
  func.func @transform_2(%arg0: i32, %arg1: i32, %arg2: i32) -> (i32, i32) {
    %c0_i32 = arith.constant 0 : i32
    %c0_i32_0 = arith.constant 0 : i32
    return %c0_i32, %arg1 : i32, i32
  }
  func.func @transform_3(%arg0: i32, %arg1: i32, %arg2: i32) -> (i32, i32) {
    %c0_i32 = arith.constant 0 : i32
    %c0_i32_0 = arith.constant 0 : i32
    %c0_i32_1 = arith.constant 0 : i32
    return %c0_i32, %c0_i32_0 : i32, i32
  }
  func.func @transform_4(%arg0: i32, %arg1: i32, %arg2: i32) -> (i32, i32) {
    %c0_i32 = arith.constant 0 : i32
    %c0_i32_0 = arith.constant 0 : i32
    %c0_i32_1 = arith.constant 0 : i32
    return %c0_i32, %c0_i32_0 : i32, i32
  }
  func.func @transform_5(%arg0: i32, %arg1: i32, %arg2: i32) -> (i32, i32) {
    %c0_i32 = arith.constant 0 : i32
    return %arg0, %arg1 : i32, i32
  }
}

module attributes {stable_mosaic.version = 11 : i64} {
  func.func @_fused_linear_kernel(%arg0: i32, %arg1: i32, %arg2: i32, %arg3: memref<16x128xbf16, #tpu.memory_space<vmem>>, %arg4: memref<128x32xbf16, #tpu.memory_space<vmem>>, %arg5: memref<1x32xf32, #tpu.memory_space<vmem>>, %arg6: memref<16x32xf32, #tpu.memory_space<vmem>>, %arg7: memref<16x32xf32, #tpu.memory_space<vmem>>, %arg8: memref<16x32xf32, #tpu.memory_space<vmem>>) attributes {dimension_semantics = [#tpu.dimension_semantics<parallel>, #tpu.dimension_semantics<parallel>, #tpu.dimension_semantics<arbitrary>], iteration_bounds = array<i64: 1, 1, 1>, scalar_prefetch = 0 : i64, scratch_operands = 1 : i64, tpu.core_type = #tpu.core_type<tc>, window_params = [{transform_indices = @transform_0, window_bounds = array<i64: 16, 128>}, {transform_indices = @transform_1, window_bounds = array<i64: 128, 32>}, {transform_indices = @transform_2, window_bounds = array<i64: 1, 32>}, {transform_indices = @transform_3, window_bounds = array<i64: 16, 32>}, {transform_indices = @transform_4, window_bounds = array<i64: 16, 32>}]} {
    %c0_i32 = arith.constant 0 : i32
    %0 = arith.cmpi eq, %arg2, %c0_i32 : i32
    %1 = arith.extui %0 : i1 to i32
    %c0_i32_0 = arith.constant 0 : i32
    %2 = arith.cmpi ne, %1, %c0_i32_0 : i32
    scf.if %2 {
      %cst_10 = arith.constant 0.000000e+00 : f32
      %12 = vector.broadcast %cst_10 : f32 to vector<16x32xf32>
      %c0_11 = arith.constant 0 : index
      %c0_12 = arith.constant 0 : index
      %13 = vector.load %arg8[%c0_11, %c0_12] : memref<16x32xf32, #tpu.memory_space<vmem>>, vector<16x32xf32>
      tpu.vector_store %arg8[%c0_11, %c0_12], %12 {strides = array<i32>} : memref<16x32xf32, #tpu.memory_space<vmem>>, vector<16x32xf32>,
    } else {
    }
    %c0 = arith.constant 0 : index
    %c0_1 = arith.constant 0 : index
    %3 = vector.load %arg3[%c0, %c0_1] : memref<16x128xbf16, #tpu.memory_space<vmem>>, vector<16x128xbf16>
    %c0_2 = arith.constant 0 : index
    %c0_3 = arith.constant 0 : index
    %4 = vector.load %arg8[%c0_2, %c0_3] : memref<16x32xf32, #tpu.memory_space<vmem>>, vector<16x32xf32>
    %c0_4 = arith.constant 0 : index
    %c0_5 = arith.constant 0 : index
    %5 = vector.load %arg4[%c0_4, %c0_5] : memref<128x32xbf16, #tpu.memory_space<vmem>>, vector<128x32xbf16>
    %cst = arith.constant dense<0.000000e+00> : vector<16x32xf32>
    %6 = tpu.matmul %3, %5, %cst {dimension_numbers = #tpu.dot_dimension_numbers<[1], [0], [0], [1], [0, 0, 1, 1], [], []>} : vector<16x128xbf16>, vector<128x32xbf16>, vector<16x32xf32> -> vector<16x32xf32>
    %7 = arith.addf %4, %6 : vector<16x32xf32>
    %c0_6 = arith.constant 0 : index
    %c0_7 = arith.constant 0 : index
    %8 = vector.load %arg8[%c0_6, %c0_7] : memref<16x32xf32, #tpu.memory_space<vmem>>, vector<16x32xf32>
    tpu.vector_store %arg8[%c0_6, %c0_7], %7 {strides = array<i32>} : memref<16x32xf32, #tpu.memory_space<vmem>>, vector<16x32xf32>,
    %c0_i32_8 = arith.constant 0 : i32
    %9 = arith.cmpi eq, %arg2, %c0_i32_8 : i32
    %10 = arith.extui %9 : i1 to i32
    %c0_i32_9 = arith.constant 0 : i32
    %11 = arith.cmpi ne, %10, %c0_i32_9 : i32
    scf.if %11 {
      %c0_10 = arith.constant 0 : index
      %c0_11 = arith.constant 0 : index
      %12 = vector.load %arg8[%c0_10, %c0_11] : memref<16x32xf32, #tpu.memory_space<vmem>>, vector<16x32xf32>
      %c0_12 = arith.constant 0 : index
      %c0_13 = arith.constant 0 : index
      %13 = vector.load %arg5[%c0_12, %c0_13] : memref<1x32xf32, #tpu.memory_space<vmem>>, vector<1x32xf32>
      %14 = vector.broadcast %13 : vector<1x32xf32> to vector<16x32xf32>
      %15 = arith.addf %12, %14 : vector<16x32xf32>
      %c0_14 = arith.constant 0 : index
      %c0_15 = arith.constant 0 : index
      %16 = vector.load %arg6[%c0_14, %c0_15] : memref<16x32xf32, #tpu.memory_space<vmem>>, vector<16x32xf32>
      %17 = arith.addf %15, %16 : vector<16x32xf32>
      %c0_16 = arith.constant 0 : index
      %c0_17 = arith.constant 0 : index
      %18 = vector.load %arg7[%c0_16, %c0_17] : memref<16x32xf32, #tpu.memory_space<vmem>>, vector<16x32xf32>
      tpu.vector_store %arg7[%c0_16, %c0_17], %17 {strides = array<i32>} : memref<16x32xf32, #tpu.memory_space<vmem>>, vector<16x32xf32>,
    } else {
    }
    return
  }
  func.func @transform_0(%arg0: i32, %arg1: i32, %arg2: i32) -> (i32, i32) {
    %c0_i32 = arith.constant 0 : i32
    return %arg0, %arg2 : i32, i32
  }
  func.func @transform_1(%arg0: i32, %arg1: i32, %arg2: i32) -> (i32, i32) {
    %c0_i32 = arith.constant 0 : i32
    return %arg2, %arg1 : i32, i32
  }
  func.func @transform_2(%arg0: i32, %arg1: i32, %arg2: i32) -> (i32, i32) {
    %c0_i32 = arith.constant 0 : i32
    %c0_i32_0 = arith.constant 0 : i32
    return %c0_i32, %arg1 : i32, i32
  }
  func.func @transform_3(%arg0: i32, %arg1: i32, %arg2: i32) -> (i32, i32) {
    %c0_i32 = arith.constant 0 : i32
    return %arg0, %arg1 : i32, i32
  }
  func.func @transform_4(%arg0: i32, %arg1: i32, %arg2: i32) -> (i32, i32) {
    %c0_i32 = arith.constant 0 : i32
    return %arg0, %arg1 : i32, i32
  }
}

module attributes {stable_mosaic.version = 11 : i64} {
  func.func @_fused_linear_kernel(%arg0: i32, %arg1: i32, %arg2: i32, %arg3: memref<8x32xf32, #tpu.memory_space<vmem>>, %arg4: memref<32x16xbf16, #tpu.memory_space<vmem>>, %arg5: memref<1x16xf32, #tpu.memory_space<vmem>>, %arg6: memref<1x32xf32, #tpu.memory_space<vmem>>, %arg7: memref<1x32xf32, #tpu.memory_space<vmem>>, %arg8: memref<8x16xf32, #tpu.memory_space<vmem>>, %arg9: memref<8x16xf32, #tpu.memory_space<vmem>>) attributes {dimension_semantics = [#tpu.dimension_semantics<parallel>, #tpu.dimension_semantics<parallel>, #tpu.dimension_semantics<arbitrary>], iteration_bounds = array<i64: 1, 1, 1>, scalar_prefetch = 0 : i64, scratch_operands = 1 : i64, tpu.core_type = #tpu.core_type<tc>, window_params = [{transform_indices = @transform_0, window_bounds = array<i64: 8, 32>}, {transform_indices = @transform_1, window_bounds = array<i64: 32, 16>}, {transform_indices = @transform_2, window_bounds = array<i64: 1, 16>}, {pipeline_mode = #tpu.pipeline_mode<synchronous>, transform_indices = @transform_3, window_bounds = array<i64: 1, 32>}, {pipeline_mode = #tpu.pipeline_mode<synchronous>, transform_indices = @transform_4, window_bounds = array<i64: 1, 32>}, {transform_indices = @transform_5, window_bounds = array<i64: 8, 16>}]} {
    %c0_i32 = arith.constant 0 : i32
    %0 = arith.cmpi eq, %arg2, %c0_i32 : i32
    %1 = arith.extui %0 : i1 to i32
    %c0_i32_0 = arith.constant 0 : i32
    %2 = arith.cmpi ne, %1, %c0_i32_0 : i32
    scf.if %2 {
      %cst_19 = arith.constant 0.000000e+00 : f32
      %37 = vector.broadcast %cst_19 : f32 to vector<8x16xf32>
      %c0_20 = arith.constant 0 : index
      %c0_21 = arith.constant 0 : index
      %38 = vector.load %arg9[%c0_20, %c0_21] : memref<8x16xf32, #tpu.memory_space<vmem>>, vector<8x16xf32>
      tpu.vector_store %arg9[%c0_20, %c0_21], %37 {strides = array<i32>} : memref<8x16xf32, #tpu.memory_space<vmem>>, vector<8x16xf32>,
    } else {
    }
    %c0 = arith.constant 0 : index
    %c0_1 = arith.constant 0 : index
    %3 = vector.load %arg3[%c0, %c0_1] : memref<8x32xf32, #tpu.memory_space<vmem>>, vector<8x32xf32>
    %cst = arith.constant dense<0.000000e+00> : vector<8xf32>
    %4 = vector.multi_reduction <add>, %3, %cst [1] : vector<8x32xf32> to vector<8xf32>
    %5 = vector.shape_cast %4 : vector<8xf32> to vector<8x1xf32>
    %cst_2 = arith.constant 3.200000e+01 : f32
    %6 = vector.broadcast %cst_2 : f32 to vector<8x1xf32>
    %7 = arith.divf %5, %6 : vector<8x1xf32>
    %8 = vector.broadcast %7 : vector<8x1xf32> to vector<8x32xf32>
    %9 = arith.subf %3, %8 : vector<8x32xf32>
    %10 = arith.mulf %9, %9 : vector<8x32xf32>
    %cst_3 = arith.constant dense<0.000000e+00> : vector<8xf32>
    %11 = vector.multi_reduction <add>, %10, %cst_3 [1] : vector<8x32xf32> to vector<8xf32>
    %12 = vector.shape_cast %11 : vector<8xf32> to vector<8x1xf32>
    %cst_4 = arith.constant 3.200000e+01 : f32
    %13 = vector.broadcast %cst_4 : f32 to vector<8x1xf32>
    %14 = arith.divf %12, %13 : vector<8x1xf32>
    %15 = vector.broadcast %7 : vector<8x1xf32> to vector<8x32xf32>
    %16 = arith.subf %3, %15 : vector<8x32xf32>
    %cst_5 = arith.constant 9.99999974E-6 : f32
    %17 = vector.broadcast %cst_5 : f32 to vector<8x1xf32>
    %18 = arith.addf %14, %17 : vector<8x1xf32>
    %19 = math.rsqrt %18 : vector<8x1xf32>
    %20 = vector.broadcast %19 : vector<8x1xf32> to vector<8x32xf32>
    %21 = arith.mulf %16, %20 : vector<8x32xf32>
    %c0_6 = arith.constant 0 : index
    %c0_7 = arith.constant 0 : index
    %22 = vector.load %arg6[%c0_6, %c0_7] : memref<1x32xf32, #tpu.memory_space<vmem>>, vector<1x32xf32>
    %23 = vector.broadcast %22 : vector<1x32xf32> to vector<8x32xf32>
    %24 = arith.mulf %21, %23 : vector<8x32xf32>
    %c0_8 = arith.constant 0 : index
    %c0_9 = arith.constant 0 : index
    %25 = vector.load %arg7[%c0_8, %c0_9] : memref<1x32xf32, #tpu.memory_space<vmem>>, vector<1x32xf32>
    %26 = vector.broadcast %25 : vector<1x32xf32> to vector<8x32xf32>
    %27 = arith.addf %24, %26 : vector<8x32xf32>
    %28 = arith.truncf %27 : vector<8x32xf32> to vector<8x32xbf16>
    %c0_10 = arith.constant 0 : index
    %c0_11 = arith.constant 0 : index
    %29 = vector.load %arg9[%c0_10, %c0_11] : memref<8x16xf32, #tpu.memory_space<vmem>>, vector<8x16xf32>
    %c0_12 = arith.constant 0 : index
    %c0_13 = arith.constant 0 : index
    %30 = vector.load %arg4[%c0_12, %c0_13] : memref<32x16xbf16, #tpu.memory_space<vmem>>, vector<32x16xbf16>
    %cst_14 = arith.constant dense<0.000000e+00> : vector<8x16xf32>
    %31 = tpu.matmul %28, %30, %cst_14 {dimension_numbers = #tpu.dot_dimension_numbers<[1], [0], [0], [1], [0, 0, 1, 1], [], []>} : vector<8x32xbf16>, vector<32x16xbf16>, vector<8x16xf32> -> vector<8x16xf32>
    %32 = arith.addf %29, %31 : vector<8x16xf32>
    %c0_15 = arith.constant 0 : index
    %c0_16 = arith.constant 0 : index
    %33 = vector.load %arg9[%c0_15, %c0_16] : memref<8x16xf32, #tpu.memory_space<vmem>>, vector<8x16xf32>
    tpu.vector_store %arg9[%c0_15, %c0_16], %32 {strides = array<i32>} : memref<8x16xf32, #tpu.memory_space<vmem>>, vector<8x16xf32>,
    %c0_i32_17 = arith.constant 0 : i32
    %34 = arith.cmpi eq, %arg2, %c0_i32_17 : i32
    %35 = arith.extui %34 : i1 to i32
    %c0_i32_18 = arith.constant 0 : i32
    %36 = arith.cmpi ne, %35, %c0_i32_18 : i32
    scf.if %36 {
      %c0_19 = arith.constant 0 : index
      %c0_20 = arith.constant 0 : index
      %37 = vector.load %arg9[%c0_19, %c0_20] : memref<8x16xf32, #tpu.memory_space<vmem>>, vector<8x16xf32>
      %c0_21 = arith.constant 0 : index
      %c0_22 = arith.constant 0 : index
      %38 = vector.load %arg5[%c0_21, %c0_22] : memref<1x16xf32, #tpu.memory_space<vmem>>, vector<1x16xf32>
      %39 = vector.broadcast %38 : vector<1x16xf32> to vector<8x16xf32>
      %40 = arith.addf %37, %39 : vector<8x16xf32>
      %c0_23 = arith.constant 0 : index
      %c0_24 = arith.constant 0 : index
      %41 = vector.load %arg8[%c0_23, %c0_24] : memref<8x16xf32, #tpu.memory_space<vmem>>, vector<8x16xf32>
      tpu.vector_store %arg8[%c0_23, %c0_24], %40 {strides = array<i32>} : memref<8x16xf32, #tpu.memory_space<vmem>>, vector<8x16xf32>,
    } else {
    }
    return
  }
  func.func @transform_0(%arg0: i32, %arg1: i32, %arg2: i32) -> (i32, i32) {
    %c0_i32 = arith.constant 0 : i32
    return %arg0, %arg2 : i32, i32
  }
  func.func @transform_1(%arg0: i32, %arg1: i32, %arg2: i32) -> (i32, i32) {
    %c0_i32 = arith.constant 0 : i32
    return %arg2, %arg1 : i32, i32
  }
  func.func @transform_2(%arg0: i32, %arg1: i32, %arg2: i32) -> (i32, i32) {
    %c0_i32 = arith.constant 0 : i32
    %c0_i32_0 = arith.constant 0 : i32
    return %c0_i32, %arg1 : i32, i32
  }
  func.func @transform_3(%arg0: i32, %arg1: i32, %arg2: i32) -> (i32, i32) {
    %c0_i32 = arith.constant 0 : i32
    %c0_i32_0 = arith.constant 0 : i32
    %c0_i32_1 = arith.constant 0 : i32
    return %c0_i32, %c0_i32_0 : i32, i32
  }
  func.func @transform_4(%arg0: i32, %arg1: i32, %arg2: i32) -> (i32, i32) {
    %c0_i32 = arith.constant 0 : i32
    %c0_i32_0 = arith.constant 0 : i32
    %c0_i32_1 = arith.constant 0 : i32
    return %c0_i32, %c0_i32_0 : i32, i32
  }
  func.func @transform_5(%arg0: i32, %arg1: i32, %arg2: i32) -> (i32, i32) {
    %c0_i32 = arith.constant 0 : i32
    return %arg0, %arg1 : i32, i32
  }
}

</mosaic_0001>

<llo_original>
// kernel: _lambda_.14
$region0: #{_lambda_.14}
  #allocation0 [shape = 'u32[]', space=smem, size = 0x4, offset = 0x4, fixed_abs, tag = 'smem constant byte address 0x4 - core index']
  #allocation1 [shape = 'u32[144,128]{1,0:T(1,128)}', space=vmem, size = 0x12000, scoped, tag = 'internal scratch']
  %s0 = inlined_call_operand.vmem [shape: f32[16,32], index: 0, kind: input, shape index: {}]
  %s1 = inlined_call_operand.vmem [shape: f32[1,32], index: 1, kind: input, shape index: {}]
  %s2 = inlined_call_operand.vmem [shape: f32[1,32], index: 2, kind: input, shape index: {}]
  %s3 = inlined_call_operand.vmem [shape: f32[16,32], index: 3, kind: output, shape index: {}]
  %s4 = sld [smem:[#allocation0]]
  $region22: #{_lambda_.14} parent=0
    _
  %s6 = ssub.s32 1, %s4
  %s7 = scalar_select 0, %s6, %s4
  // Predicated region
  $region2: #{_lambda_.14} parent=0 // pred_check
    _
  $region3: #{_lambda_.14} parent=0 // pred_check_branch
    %9 = sbr.rel (0) target = $region5
  $region4: #{_lambda_.14} parent=0 // pred_region
    _
  $region5: #{_lambda_.14} parent=0 // pred_fallthru
    _
  // Predicated region
  $region6: #{_lambda_.14} parent=0 // pred_check
    _
  $region7: #{_lambda_.14} parent=0 // pred_check_branch
    %11 = sbr.rel (0) target = $region9
  $region8: #{_lambda_.14} parent=0 // pred_region
    _
  $region9: #{_lambda_.14} parent=0 // pred_fallthru
    _
  // Predicated region
  $region10: #{_lambda_.14} parent=0 // pred_check
    _
  $region11: #{_lambda_.14} parent=0 // pred_check_branch
    %13 = sbr.rel (0) target = $region13
  $region12: #{_lambda_.14} parent=0 // pred_region
    _
  $region13: #{_lambda_.14} parent=0 // pred_fallthru
    _
  %v14 = vld [vmem:[%s0] sm:$0xff]
  %v15 = vld [vmem:[%s0 + $0x8] sm:$0xff]
  %vm16 = vcmask 261120
  %v17 = vsel %vm16, %v14, 0.0
  %18 = vadd.xlane.f32.xlu0 %v17
  %v19 = vpop.xlane.xlu0 %18
  %v20 = vsel %vm16, %v15, 0.0
  %21 = vadd.xlane.f32.xlu0 %v20
  %v22 = vpop.xlane.xlu0 %21
  %v23 = vrcp.pop 32.0
  %v24 = vmul.f32 %v19, %v23
  %v25 = vmul.f32 %v22, %v23
  %v26 = vsub.f32 %v14, %v24
  %v27 = vsub.f32 %v15, %v25
  %v28 = vmul.f32 %v26, %v26
  %v29 = vmul.f32 %v27, %v27
  %v30 = vsel %vm16, %v28, 0.0
  %31 = vadd.xlane.f32.xlu0 %v30
  %v32 = vpop.xlane.xlu0 %31
  %v33 = vsel %vm16, %v29, 0.0
  %34 = vadd.xlane.f32.xlu0 %v33
  %v35 = vpop.xlane.xlu0 %34
  %v36 = vmul.f32 %v32, %v23
  %v37 = vmul.f32 %v35, %v23
  %v38 = vadd.f32 %v36, 1e-05
  %v39 = vadd.f32 %v37, 1e-05
  %v40 = vrsqrt.pop %v38
  %v41 = vrsqrt.pop %v39
  %v42 = vmul.f32 %v26, %v40
  %v43 = vmul.f32 %v27, %v41
  %v44 = vld [vmem:[%s1] sm:$0x1]
  %v46 = vlaneseq
  %v47 = vshrl.u32 %v46, 7
  %v48 = vsub.s32 0, %v47
  %v49 = vrot.slane %v44, %v48
  %v51 = vmul.f32 %v42, %v49
  %v52 = vmul.f32 %v43, %v49
  %v53 = vld [vmem:[%s2] sm:$0x1]
  %v55 = vlaneseq
  %v56 = vshrl.u32 %v55, 7
  %v57 = vsub.s32 0, %v56
  %v58 = vrot.slane %v53, %v57
  %v60 = vadd.f32 %v51, %v58
  %v61 = vadd.f32 %v52, %v58
  %62 = vst.msk [vmem:[%s3] sm:$0xff] %vm16, %v60
  %63 = vst.msk [vmem:[%s3 + $0x8] sm:$0xff] %vm16, %v61
  // Predicated region
  $region14: #{_lambda_.14} parent=0 // pred_check
    _
  $region15: #{_lambda_.14} parent=0 // pred_check_branch
    %65 = sbr.rel (0) target = $region17
  $region16: #{_lambda_.14} parent=0 // pred_region
    _
  $region17: #{_lambda_.14} parent=0 // pred_fallthru
    _
  // Predicated region
  $region18: #{_lambda_.14} parent=0 // pred_check
    _
  $region19: #{_lambda_.14} parent=0 // pred_check_branch
    %67 = sbr.rel (0) target = $region21
  $region20: #{_lambda_.14} parent=0 // pred_region
    _
  $region21: #{_lambda_.14} parent=0 // pred_fallthru
    _

// kernel: _lambda_.15
$region0: #{_lambda_.15}
  #allocation0 [shape = 'u32[]', space=smem, size = 0x4, offset = 0x4, fixed_abs, tag = 'smem constant byte address 0x4 - core index']
  #allocation1 [shape = 'u32[144,128]{1,0:T(1,128)}', space=vmem, size = 0x12000, scoped, tag = 'internal scratch']
  #allocation2 [shape = 'f32[16,96]{1,0:T(8,128)}', space=vmem, size = 0x2000, scoped, tag = 'scratch operand']
  %s0 = inlined_call_operand.vmem [shape: f32[16,32], index: 0, kind: input, shape index: {}]
  %s1 = inlined_call_operand.vmem [shape: bf16[32,96], index: 1, kind: input, shape index: {}]
  %s2 = inlined_call_operand.vmem [shape: f32[1,96], index: 2, kind: input, shape index: {}]
  %s3 = inlined_call_operand.vmem [shape: f32[1,32], index: 3, kind: input, shape index: {}]
  %s4 = inlined_call_operand.vmem [shape: f32[1,32], index: 4, kind: input, shape index: {}]
  %s5 = inlined_call_operand.vmem [shape: bf16[16,96], index: 5, kind: output, shape index: {}]
  %s6 = sld [smem:[#allocation0]]
  $region38: #{_lambda_.15} parent=0
    _
  %s8 = ssub.s32 1, %s6
  %s9 = scalar_select 0, %s8, %s6
  // Predicated region
  $region2: #{_lambda_.15} parent=0 // pred_check
    _
  $region3: #{_lambda_.15} parent=0 // pred_check_branch
    %11 = sbr.rel (0) target = $region5
  $region4: #{_lambda_.15} parent=0 // pred_region
    _
  $region5: #{_lambda_.15} parent=0 // pred_fallthru
    _
  // Predicated region
  $region6: #{_lambda_.15} parent=0 // pred_check
    _
  $region7: #{_lambda_.15} parent=0 // pred_check_branch
    %13 = sbr.rel (0) target = $region9
  $region8: #{_lambda_.15} parent=0 // pred_region
    _
  $region9: #{_lambda_.15} parent=0 // pred_fallthru
    _
  // Predicated region
  $region10: #{_lambda_.15} parent=0 // pred_check
    _
  $region11: #{_lambda_.15} parent=0 // pred_check_branch
    %15 = sbr.rel (0) target = $region13
  $region12: #{_lambda_.15} parent=0 // pred_region
    _
  $region13: #{_lambda_.15} parent=0 // pred_fallthru
    _
  // Predicated region
  $region14: #{_lambda_.15} parent=0 // pred_check
    _
  $region15: #{_lambda_.15} parent=0 // pred_check_branch
    %17 = sbr.rel (0) target = $region17
  $region16: #{_lambda_.15} parent=0 // pred_region
    _
  $region17: #{_lambda_.15} parent=0 // pred_fallthru
    _
  // Predicated region
  $region18: #{_lambda_.15} parent=0 // pred_check
    _
  $region19: #{_lambda_.15} parent=0 // pred_check_branch
    %19 = sbr.rel (0) target = $region21
  $region20: #{_lambda_.15} parent=0 // pred_region
    _
  $region21: #{_lambda_.15} parent=0 // pred_fallthru
    _
  %p21 = scmp.eq.s32.totalorder 0, 0
  // Predicated region
  $region22: #{_lambda_.15} parent=0 // pred_check
    %p22 = pneg %p21
  $region23: #{_lambda_.15} parent=0 // pred_check_branch
    %24 = sbr.rel (%p22) target = $region25
  $region24: #{_lambda_.15} parent=0 // pred_region
    %vm25 = vcmask 785408
    %26 = vst.msk [vmem:[#allocation2] sm:$0xff] %vm25, 0.0
    %27 = vst.msk [vmem:[#allocation2 + $0x8] sm:$0xff] %vm25, 0.0
  $region25: #{_lambda_.15} parent=0 // pred_fallthru
    _
  %v28 = vld [vmem:[%s0] sm:$0xff]
  %v29 = vld [vmem:[%s0 + $0x8] sm:$0xff]
  %vm30 = vcmask 261120
  %v31 = vsel %vm30, %v28, 0.0
  %32 = vadd.xlane.f32.xlu0 %v31
  %v33 = vpop.xlane.xlu0 %32
  %v34 = vsel %vm30, %v29, 0.0
  %35 = vadd.xlane.f32.xlu0 %v34
  %v36 = vpop.xlane.xlu0 %35
  %v37 = vrcp.pop 32.0
  %v38 = vmul.f32 %v33, %v37
  %v39 = vmul.f32 %v36, %v37
  %v40 = vsub.f32 %v28, %v38
  %v41 = vsub.f32 %v29, %v39
  %v42 = vmul.f32 %v40, %v40
  %v43 = vmul.f32 %v41, %v41
  %v44 = vsel %vm30, %v42, 0.0
  %45 = vadd.xlane.f32.xlu0 %v44
  %v46 = vpop.xlane.xlu0 %45
  %v47 = vsel %vm30, %v43, 0.0
  %48 = vadd.xlane.f32.xlu0 %v47
  %v49 = vpop.xlane.xlu0 %48
  %v50 = vmul.f32 %v46, %v37
  %v51 = vmul.f32 %v49, %v37
  %v52 = vadd.f32 %v50, 1e-05
  %v53 = vadd.f32 %v51, 1e-05
  %v54 = vrsqrt.pop %v52
  %v55 = vrsqrt.pop %v53
  %v56 = vmul.f32 %v40, %v54
  %v57 = vmul.f32 %v41, %v55
  %v58 = vld [vmem:[%s3] sm:$0x1]
  %v60 = vlaneseq
  %v61 = vshrl.u32 %v60, 7
  %v62 = vsub.s32 0, %v61
  %v63 = vrot.slane %v58, %v62
  %v65 = vmul.f32 %v56, %v63
  %v66 = vmul.f32 %v57, %v63
  %v67 = vld [vmem:[%s4] sm:$0x1]
  %v69 = vlaneseq
  %v70 = vshrl.u32 %v69, 7
  %v71 = vsub.s32 0, %v70
  %v72 = vrot.slane %v67, %v71
  %v74 = vadd.f32 %v65, %v72
  %v75 = vadd.f32 %v66, %v72
  %v76 = vpack.c.bf16 %v75, %v74
  %v77 = vld [vmem:[#allocation2] sm:$0xff]
  %v78 = vld [vmem:[#allocation2 + $0x8] sm:$0xff]
  %v79 = vld [vmem:[%s1] sm:$0xf]
  %v80 = vld [vmem:[%s1 + $0x4] sm:$0xf]
  %v81 = vld [vmem:[%s1 + $0x8] sm:$0xf]
  %v82 = vld [vmem:[%s1 + $0xc] sm:$0xf]
  %v87 = vunpack.c.l.b16 %v79
  %v88 = vunpack.c.l.b16 %v80
  %v89 = vunpack.c.l.b16 %v81
  %v90 = vunpack.c.l.b16 %v82
  %v91 = vpack.c.b16 %v88, %v87
  %v92 = vpack.c.b16 %v90, %v89
  %v96 = vsel %vm30, %v76, 0
  %98 = vmatprep.subr.bf16.mxu0 0
  %99 = vmatpush1.bf16.msra.mxu0 %v91
  %100 = vmatprep.subr.bf16.mxu0 0
  %101 = vmatpush1.bf16.msra.mxu0 %v92
  %102 = vmatprep.subr.bf16.mxu0 0
  %103 = vmatpush1.bf16.msra.mxu0 0
  %104 = vmatprep.subr.bf16.mxu0 0
  %105 = vmatpush1.bf16.msra.mxu0 0
  %106 = vmatprep.subr.bf16.mxu0 0
  %107 = vmatpush1.bf16.msra.mxu0 0
  %108 = vmatprep.subr.bf16.mxu0 0
  %109 = vmatpush1.bf16.msra.mxu0 0
  %110 = vmatprep.subr.bf16.mxu0 0
  %111 = vmatpush1.bf16.msra.mxu0 0
  %112 = vmatprep.subr.bf16.mxu0 0
  %113 = vmatpush1.bf16.msra.mxu0 0
  %114 = vmatprep.subr.bf16.mxu0 0
  %115 = vmatpush1.bf16.msra.mxu0 0
  %116 = vmatprep.subr.bf16.mxu0 0
  %117 = vmatpush1.bf16.msra.mxu0 0
  %118 = vmatprep.subr.bf16.mxu0 0
  %119 = vmatpush1.bf16.msra.mxu0 0
  %120 = vmatprep.subr.bf16.mxu0 0
  %121 = vmatpush1.bf16.msra.mxu0 0
  %122 = vmatprep.subr.bf16.mxu0 0
  %123 = vmatpush1.bf16.msra.mxu0 0
  %124 = vmatprep.subr.bf16.mxu0 0
  %125 = vmatpush1.bf16.msra.mxu0 0
  %126 = vmatprep.subr.bf16.mxu0 0
  %127 = vmatpush1.bf16.msra.mxu0 0
  %128 = vmatprep.subr.bf16.mxu0 0
  %129 = vmatpush1.bf16.msra.mxu0 0
  %130 = vmatprep.mubr.bf16.mxu0 0
  %131 = vmatmul.mubr.bf16.gmra.mrb[0].mxu0 %v96
  %v132 = vpop.f32.mrb[0].mxu0
  %v133 = vadd.f32 0.0, %v132
  %v134 = vpop.f32.mrb[0].mxu0
  %v135 = vpop.f32.mrb[0].mxu0
  %v136 = vadd.f32 0.0, %v135
  %v137 = vpop.f32.mrb[0].mxu0
  %138 = vdwg.mxu0
  %v139 = vadd.f32 %v77, %v133
  %v140 = vadd.f32 %v78, %v136
  %vm141 = vcmask 785408
  %142 = vst.msk [vmem:[#allocation2] sm:$0xff] %vm141, %v139
  %143 = vst.msk [vmem:[#allocation2 + $0x8] sm:$0xff] %vm141, %v140
  // Predicated region
  $region26: #{_lambda_.15} parent=0 // pred_check
    %p144 = pneg %p21
  $region27: #{_lambda_.15} parent=0 // pred_check_branch
    %146 = sbr.rel (%p144) target = $region29
  $region28: #{_lambda_.15} parent=0 // pred_region
    %v147 = vld [vmem:[#allocation2] sm:$0xff]
    %v148 = vld [vmem:[#allocation2 + $0x8] sm:$0xff]
    %v149 = vld [vmem:[%s2] sm:$0x1]
    %v151 = vlaneseq
    %v152 = vshrl.u32 %v151, 7
    %v153 = vsub.s32 0, %v152
    %v154 = vrot.slane %v149, %v153
    %v156 = vadd.f32 %v147, %v154
    %v157 = vadd.f32 %v148, %v154
    %v158 = vpack.c.bf16 %v157, %v156
    %v160 = vunpack.c.l.b16 %v158
    %v161 = vunpack.c.h.b16 %v158
    %v162 = vpack.c.b16 %v160, %v160
    %v163 = vpack.c.b16 %v161, %v161
    %vm166 = vcmask 781312
    %167 = vst.msk [vmem:[%s5] sm:$0xf] %vm166, %v162
    %168 = vst.msk [vmem:[%s5 + $0x4] sm:$0xf] %vm166, %v163
  $region29: #{_lambda_.15} parent=0 // pred_fallthru
    _
  // Predicated region
  $region30: #{_lambda_.15} parent=0 // pred_check
    _
  $region31: #{_lambda_.15} parent=0 // pred_check_branch
    %170 = sbr.rel (0) target = $region33
  $region32: #{_lambda_.15} parent=0 // pred_region
    _
  $region33: #{_lambda_.15} parent=0 // pred_fallthru
    _
  // Predicated region
  $region34: #{_lambda_.15} parent=0 // pred_check
    _
  $region35: #{_lambda_.15} parent=0 // pred_check_branch
    %172 = sbr.rel (0) target = $region37
  $region36: #{_lambda_.15} parent=0 // pred_region
    _
  $region37: #{_lambda_.15} parent=0 // pred_fallthru
    _

// kernel: _lambda_.13
$region0: #{_lambda_.13}
  #allocation0 [shape = 'u32[]', space=smem, size = 0x4, offset = 0x4, fixed_abs, tag = 'smem constant byte address 0x4 - core index']
  #allocation1 [shape = 'u32[144,128]{1,0:T(1,128)}', space=vmem, size = 0x12000, scoped, tag = 'internal scratch']
  #allocation2 [shape = 'f32[8,32]{1,0:T(8,128)}', space=vmem, size = 0x1000, scoped, tag = 'scratch operand']
  %s0 = inlined_call_operand.vmem [shape: f32[8,192], index: 0, kind: input, shape index: {}]
  %s1 = inlined_call_operand.vmem [shape: bf16[192,32], index: 1, kind: input, shape index: {}]
  %s2 = inlined_call_operand.vmem [shape: f32[1,32], index: 2, kind: input, shape index: {}]
  %s3 = inlined_call_operand.vmem [shape: f32[8,32], index: 3, kind: output, shape index: {}]
  %s4 = sld [smem:[#allocation0]]
  $region30: #{_lambda_.13} parent=0
    _
  %s6 = ssub.s32 1, %s4
  %s7 = scalar_select 0, %s6, %s4
  // Predicated region
  $region2: #{_lambda_.13} parent=0 // pred_check
    _
  $region3: #{_lambda_.13} parent=0 // pred_check_branch
    %9 = sbr.rel (0) target = $region5
  $region4: #{_lambda_.13} parent=0 // pred_region
    _
  $region5: #{_lambda_.13} parent=0 // pred_fallthru
    _
  // Predicated region
  $region6: #{_lambda_.13} parent=0 // pred_check
    _
  $region7: #{_lambda_.13} parent=0 // pred_check_branch
    %11 = sbr.rel (0) target = $region9
  $region8: #{_lambda_.13} parent=0 // pred_region
    _
  $region9: #{_lambda_.13} parent=0 // pred_fallthru
    _
  // Predicated region
  $region10: #{_lambda_.13} parent=0 // pred_check
    _
  $region11: #{_lambda_.13} parent=0 // pred_check_branch
    %13 = sbr.rel (0) target = $region13
  $region12: #{_lambda_.13} parent=0 // pred_region
    _
  $region13: #{_lambda_.13} parent=0 // pred_fallthru
    _
  %p15 = scmp.eq.s32.totalorder 0, 0
  // Predicated region
  $region14: #{_lambda_.13} parent=0 // pred_check
    %p16 = pneg %p15
  $region15: #{_lambda_.13} parent=0 // pred_check_branch
    %18 = sbr.rel (%p16) target = $region17
  $region16: #{_lambda_.13} parent=0 // pred_region
    %vm19 = vcmask 261120
    %20 = vst.msk [vmem:[#allocation2] sm:$0xff] %vm19, 0.0
  $region17: #{_lambda_.13} parent=0 // pred_fallthru
    _
  %v21 = vld [vmem:[%s0] sm:$0xff]
  %v22 = vld [vmem:[%s0 + $0x8] sm:$0xff]
  %v23 = vpack.c.bf16 %v21, %v21
  %v24 = vpack.c.bf16 %v22, %v22
  %v25 = vld [vmem:[#allocation2] sm:$0xff]
  %v26 = vld [vmem:[%s1] sm:$0xf]
  %v27 = vld [vmem:[%s1 + $0x4] sm:$0xf]
  %v28 = vld [vmem:[%s1 + $0x8] sm:$0xf]
  %v29 = vld [vmem:[%s1 + $0xc] sm:$0xf]
  %v30 = vld [vmem:[%s1 + $0x10] sm:$0xf]
  %v31 = vld [vmem:[%s1 + $0x14] sm:$0xf]
  %v32 = vld [vmem:[%s1 + $0x18] sm:$0xf]
  %v33 = vld [vmem:[%s1 + $0x1c] sm:$0xf]
  %v34 = vld [vmem:[%s1 + $0x20] sm:$0xf]
  %v35 = vld [vmem:[%s1 + $0x24] sm:$0xf]
  %v36 = vld [vmem:[%s1 + $0x28] sm:$0xf]
  %v37 = vld [vmem:[%s1 + $0x2c] sm:$0xf]
  %v38 = vld [vmem:[%s1 + $0x30] sm:$0xf]
  %v39 = vld [vmem:[%s1 + $0x34] sm:$0xf]
  %v40 = vld [vmem:[%s1 + $0x38] sm:$0xf]
  %v41 = vld [vmem:[%s1 + $0x3c] sm:$0xf]
  %v42 = vld [vmem:[%s1 + $0x40] sm:$0xf]
  %v43 = vld [vmem:[%s1 + $0x44] sm:$0xf]
  %v44 = vld [vmem:[%s1 + $0x48] sm:$0xf]
  %v45 = vld [vmem:[%s1 + $0x4c] sm:$0xf]
  %v46 = vld [vmem:[%s1 + $0x50] sm:$0xf]
  %v47 = vld [vmem:[%s1 + $0x54] sm:$0xf]
  %v48 = vld [vmem:[%s1 + $0x58] sm:$0xf]
  %v49 = vld [vmem:[%s1 + $0x5c] sm:$0xf]
  %v74 = vunpack.c.l.b16 %v26
  %v75 = vunpack.c.l.b16 %v27
  %v76 = vunpack.c.l.b16 %v28
  %v77 = vunpack.c.l.b16 %v29
  %v78 = vunpack.c.l.b16 %v30
  %v79 = vunpack.c.l.b16 %v31
  %v80 = vunpack.c.l.b16 %v32
  %v81 = vunpack.c.l.b16 %v33
  %v82 = vunpack.c.l.b16 %v34
  %v83 = vunpack.c.l.b16 %v35
  %v84 = vunpack.c.l.b16 %v36
  %v85 = vunpack.c.l.b16 %v37
  %v86 = vunpack.c.l.b16 %v38
  %v87 = vunpack.c.l.b16 %v39
  %v88 = vunpack.c.l.b16 %v40
  %v89 = vunpack.c.l.b16 %v41
  %v90 = vunpack.c.l.b16 %v42
  %v91 = vunpack.c.l.b16 %v43
  %v92 = vunpack.c.l.b16 %v44
  %v93 = vunpack.c.l.b16 %v45
  %v94 = vunpack.c.l.b16 %v46
  %v95 = vunpack.c.l.b16 %v47
  %v96 = vunpack.c.l.b16 %v48
  %v97 = vunpack.c.l.b16 %v49
  %v98 = vpack.c.b16 %v75, %v74
  %v99 = vpack.c.b16 %v77, %v76
  %v100 = vpack.c.b16 %v79, %v78
  %v101 = vpack.c.b16 %v81, %v80
  %v102 = vpack.c.b16 %v83, %v82
  %v103 = vpack.c.b16 %v85, %v84
  %v104 = vpack.c.b16 %v87, %v86
  %v105 = vpack.c.b16 %v89, %v88
  %v106 = vpack.c.b16 %v91, %v90
  %v107 = vpack.c.b16 %v93, %v92
  %v108 = vpack.c.b16 %v95, %v94
  %v109 = vpack.c.b16 %v97, %v96
  %vm122 = vcmask 523264
  %v124 = vsel %vm122, %v24, 0
  %126 = vmatprep.subr.bf16.mxu0 0
  %127 = vmatpush1.bf16.msra.mxu0 %v98
  %128 = vmatprep.subr.bf16.mxu0 0
  %129 = vmatpush1.bf16.msra.mxu0 %v99
  %130 = vmatprep.subr.bf16.mxu0 0
  %131 = vmatpush1.bf16.msra.mxu0 %v100
  %132 = vmatprep.subr.bf16.mxu0 0
  %133 = vmatpush1.bf16.msra.mxu0 %v101
  %134 = vmatprep.subr.bf16.mxu0 0
  %135 = vmatpush1.bf16.msra.mxu0 %v102
  %136 = vmatprep.subr.bf16.mxu0 0
  %137 = vmatpush1.bf16.msra.mxu0 %v103
  %138 = vmatprep.subr.bf16.mxu0 0
  %139 = vmatpush1.bf16.msra.mxu0 %v104
  %140 = vmatprep.subr.bf16.mxu0 0
  %141 = vmatpush1.bf16.msra.mxu0 %v105
  %142 = vmatprep.subr.bf16.mxu0 0
  %143 = vmatpush1.bf16.msra.mxu0 %v106
  %144 = vmatprep.subr.bf16.mxu0 0
  %145 = vmatpush1.bf16.msra.mxu0 %v107
  %146 = vmatprep.subr.bf16.mxu0 0
  %147 = vmatpush1.bf16.msra.mxu0 %v108
  %148 = vmatprep.subr.bf16.mxu0 0
  %149 = vmatpush1.bf16.msra.mxu0 %v109
  %150 = vmatprep.subr.bf16.mxu0 0
  %151 = vmatpush1.bf16.msra.mxu0 0
  %152 = vmatprep.subr.bf16.mxu0 0
  %153 = vmatpush1.bf16.msra.mxu0 0
  %154 = vmatprep.subr.bf16.mxu0 0
  %155 = vmatpush1.bf16.msra.mxu0 0
  %156 = vmatprep.subr.bf16.mxu0 0
  %157 = vmatpush1.bf16.msra.mxu0 0
  %158 = vmatprep.mubr.bf16.mxu0 %v124
  %159 = vmatmul.mubr.bf16.gmra.mrb[0].mxu0 %v23
  %v160 = vpop.f32.mrb[0].mxu0
  %v161 = vadd.f32 0.0, %v160
  %v162 = vpop.f32.mrb[0].mxu0
  %v163 = vpop.f32.mrb[0].mxu0
  %v164 = vpop.f32.mrb[0].mxu0
  %165 = vdwg.mxu0
  %v166 = vadd.f32 %v25, %v161
  %vm167 = vcmask 261120
  %168 = vst.msk [vmem:[#allocation2] sm:$0xff] %vm167, %v166
  // Predicated region
  $region18: #{_lambda_.13} parent=0 // pred_check
    %p169 = pneg %p15
  $region19: #{_lambda_.13} parent=0 // pred_check_branch
    %171 = sbr.rel (%p169) target = $region21
  $region20: #{_lambda_.13} parent=0 // pred_region
    %v172 = vld [vmem:[#allocation2] sm:$0xff]
    %v173 = vld [vmem:[%s2] sm:$0x1]
    %v175 = vlaneseq
    %v176 = vshrl.u32 %v175, 7
    %v177 = vsub.s32 0, %v176
    %v178 = vrot.slane %v173, %v177
    %v180 = vadd.f32 %v172, %v178
    %181 = vst.msk [vmem:[%s3] sm:$0xff] %vm167, %v180
  $region21: #{_lambda_.13} parent=0 // pred_fallthru
    _
  // Predicated region
  $region22: #{_lambda_.13} parent=0 // pred_check
    _
  $region23: #{_lambda_.13} parent=0 // pred_check_branch
    %183 = sbr.rel (0) target = $region25
  $region24: #{_lambda_.13} parent=0 // pred_region
    _
  $region25: #{_lambda_.13} parent=0 // pred_fallthru
    _
  // Predicated region
  $region26: #{_lambda_.13} parent=0 // pred_check
    _
  $region27: #{_lambda_.13} parent=0 // pred_check_branch
    %185 = sbr.rel (0) target = $region29
  $region28: #{_lambda_.13} parent=0 // pred_region
    _
  $region29: #{_lambda_.13} parent=0 // pred_fallthru
    _

// kernel: _lambda_.16
$region0: #{_lambda_.16}
  #allocation0 [shape = 'u32[]', space=smem, size = 0x4, offset = 0x4, fixed_abs, tag = 'smem constant byte address 0x4 - core index']
  #allocation1 [shape = 'u32[144,128]{1,0:T(1,128)}', space=vmem, size = 0x12000, scoped, tag = 'internal scratch']
  %s0 = inlined_call_operand.vmem [shape: bf16[2,5,32], index: 0, kind: input, shape index: {}]
  %s1 = inlined_call_operand.vmem [shape: bf16[2,5,32], index: 1, kind: input, shape index: {}]
  %s2 = inlined_call_operand.vmem [shape: bf16[2,5,32], index: 2, kind: input, shape index: {}]
  %s3 = inlined_call_operand.vmem [shape: bf16[2,5,32], index: 3, kind: output, shape index: {}]
  %s4 = sld [smem:[#allocation0]]
  $region45: #{_lambda_.16} parent=0
    _
  %s6 = ssub.s32 1, %s4
  %s7 = scalar_select 0, %s6, %s4
  loop: start=0, step=1, limit=4
  $region2: #{_lambda_.16} parent=0 // loop_pre_header
    _
  $region3: #{_lambda_.16} parent=0 // loop_header
    %s9 = sphi 0, %s13
    %p10 = scmp.ge.s32.totalorder %s9, 4
    %s16 = sphi 0, %s28
    %s17 = sphi 0, %s24
    %s18 = sphi 0, %s16
    %s19 = sphi 0, %s17
    %s20 = sphi 0, %s18
    %s21 = sphi 0, %s19
    %s33 = sphi 0, %s35
    %s36 = sphi 0, %s33
    %s37 = sphi 0, %s36
    %s53 = sphi 0, %s37
    %s61 = sphi 0, %s63
    %s64 = sphi 0, %s61
    %s65 = sphi 0, %s64
    %s81 = sphi 0, %s65
    %s89 = sphi 0, %s91
    %s92 = sphi 0, %s89
    %s93 = sphi 0, %s92
    %s109 = sphi 0, %s93
    %s117 = sphi 0, %s119
    %s120 = sphi 0, %s117
    %s121 = sphi 0, %s120
    %s137 = sphi 0, %s121
  $region4: #{_lambda_.16} parent=0 // loop_header_branch
    %12 = sbr.rel (%p10) target = $region8
  $region5: #{_lambda_.16} parent=0 // loop_body
    %s14 = ssub.s32 %s9, 1
    %s15 = ssub.s32 %s9, 2
    %s22 = sadd.s32 1, %s17
    %p23 = scmp.ge.s32.totalorder %s22, 1
    %s24 = scalar_select %p23, 0, %s22
    %s25 = sadd.s32 1, %s16
    %s26 = scalar_select %p23, %s25, %s16
    %p27 = scmp.ge.s32.totalorder %s26, 2
    %s28 = scalar_select %p27, 0, %s26
    %s29 = ssub.s32 %s16, %s28
    %s30 = ssub.s32 %s17, %s24
    %s31 = sor.u32 %s29, %s30
    %p32 = scmp.eq.s32.totalorder %s31, 0
    %s34 = sadd.s32 %s33, 1
    %s35 = scalar_select %p32, %s33, %s34
    %p38 = pneg %p32
    %p39 = scmp.eq.s32.totalorder %s9, 1
    %p40 = por %p38, %p39
    %p41 = scmp.ne.s32.totalorder %s33, %s36
    %p42 = scmp.eq.s32.totalorder %s9, 0
    %p43 = por %p41, %p42
    %p44 = scmp.ne.s32.totalorder %s33, %s36
    %p45 = scmp.eq.s32.totalorder %s14, 1
    %p46 = por %p44, %p45
    %p47 = scmp.ne.s32.totalorder %s36, %s37
    %p48 = scmp.eq.s32.totalorder %s14, 0
    %p49 = por %p47, %p48
    %p50 = scmp.ne.s32.totalorder %s36, %s37
    %p51 = scmp.eq.s32.totalorder %s15, 1
    %p52 = por %p50, %p51
    %p54 = scmp.ne.s32.totalorder %s37, %s53
    %p55 = scmp.eq.s32.totalorder %s15, 0
    %p56 = por %p54, %p55
    %s57 = ssub.s32 %s16, %s28
    %s58 = ssub.s32 %s17, %s24
    %s59 = sor.u32 %s57, %s58
    %p60 = scmp.eq.s32.totalorder %s59, 0
    %s62 = sadd.s32 %s61, 1
    %s63 = scalar_select %p60, %s61, %s62
    %p66 = pneg %p60
    %p67 = scmp.eq.s32.totalorder %s9, 1
    %p68 = por %p66, %p67
    %p69 = scmp.ne.s32.totalorder %s61, %s64
    %p70 = scmp.eq.s32.totalorder %s9, 0
    %p71 = por %p69, %p70
    %p72 = scmp.ne.s32.totalorder %s61, %s64
    %p73 = scmp.eq.s32.totalorder %s14, 1
    %p74 = por %p72, %p73
    %p75 = scmp.ne.s32.totalorder %s64, %s65
    %p76 = scmp.eq.s32.totalorder %s14, 0
    %p77 = por %p75, %p76
    %p78 = scmp.ne.s32.totalorder %s64, %s65
    %p79 = scmp.eq.s32.totalorder %s15, 1
    %p80 = por %p78, %p79
    %p82 = scmp.ne.s32.totalorder %s65, %s81
    %p83 = scmp.eq.s32.totalorder %s15, 0
    %p84 = por %p82, %p83
    %s85 = ssub.s32 %s16, %s28
    %s86 = ssub.s32 %s17, %s24
    %s87 = sor.u32 %s85, %s86
    %p88 = scmp.eq.s32.totalorder %s87, 0
    %s90 = sadd.s32 %s89, 1
    %s91 = scalar_select %p88, %s89, %s90
    %p94 = pneg %p88
    %p95 = scmp.eq.s32.totalorder %s9, 1
    %p96 = por %p94, %p95
    %p97 = scmp.ne.s32.totalorder %s89, %s92
    %p98 = scmp.eq.s32.totalorder %s9, 0
    %p99 = por %p97, %p98
    %p100 = scmp.ne.s32.totalorder %s89, %s92
    %p101 = scmp.eq.s32.totalorder %s14, 1
    %p102 = por %p100, %p101
    %p103 = scmp.ne.s32.totalorder %s92, %s93
    %p104 = scmp.eq.s32.totalorder %s14, 0
    %p105 = por %p103, %p104
    %p106 = scmp.ne.s32.totalorder %s92, %s93
    %p107 = scmp.eq.s32.totalorder %s15, 1
    %p108 = por %p106, %p107
    %p110 = scmp.ne.s32.totalorder %s93, %s109
    %p111 = scmp.eq.s32.totalorder %s15, 0
    %p112 = por %p110, %p111
    %s113 = ssub.s32 %s16, %s28
    %s114 = ssub.s32 %s17, %s24
    %s115 = sor.u32 %s113, %s114
    %p116 = scmp.eq.s32.totalorder %s115, 0
    %s118 = sadd.s32 %s117, 1
    %s119 = scalar_select %p116, %s117, %s118
    %p122 = pneg %p116
    %p123 = scmp.eq.s32.totalorder %s9, 1
    %p124 = por %p122, %p123
    %p125 = scmp.ne.s32.totalorder %s117, %s120
    %p126 = scmp.eq.s32.totalorder %s9, 0
    %p127 = por %p125, %p126
    %p128 = scmp.ne.s32.totalorder %s117, %s120
    %p129 = scmp.eq.s32.totalorder %s14, 1
    %p130 = por %p128, %p129
    %p131 = scmp.ne.s32.totalorder %s120, %s121
    %p132 = scmp.eq.s32.totalorder %s14, 0
    %p133 = por %p131, %p132
    %p134 = scmp.ne.s32.totalorder %s120, %s121
    %p135 = scmp.eq.s32.totalorder %s15, 1
    %p136 = por %p134, %p135
    %p138 = scmp.ne.s32.totalorder %s121, %s137
    %p139 = scmp.eq.s32.totalorder %s15, 0
    %p140 = por %p138, %p139
    %p141 = scmp.le.s32.totalorder 1, %s9
    %p142 = scmp.lt.s32.totalorder %s9, 3
    %p143 = pnand %p141, %p142
    %p144 = pneg %p143
    // Predicated region
    $region9: #{_lambda_.16} parent=5 // pred_check
      _
    $region10: #{_lambda_.16} parent=5 // pred_check_branch
      %146 = sbr.rel (%p143) target = $region12
    $region11: #{_lambda_.16} parent=5 // pred_region
      %s147 = ssub.s32 %s9, 1
    $region12: #{_lambda_.16} parent=5 // pred_fallthru
      _
    %p148 = scmp.lt.s32.totalorder %s9, 2
    // Predicated region
    $region13: #{_lambda_.16} parent=5 // pred_check
      %p149 = pneg %p148
    $region14: #{_lambda_.16} parent=5 // pred_check_branch
      %151 = sbr.rel (%p149) target = $region16
    $region15: #{_lambda_.16} parent=5 // pred_region
      // Predicated region
      $region17: #{_lambda_.16} parent=15 // pred_check
        %p152 = pneg %p43
      $region18: #{_lambda_.16} parent=15 // pred_check_branch
        %154 = sbr.rel (%p152) target = $region20
      $region19: #{_lambda_.16} parent=15 // pred_region
        %p155 = scmp.lt.s32.totalorder %s16, 1
        %s156 = scalar_select %p155, %s16, 1
        %p157 = scmp.lt.s32.totalorder %s17, 0
        %s158 = scalar_select %p157, %s17, 0
        %s159 = sadd.s32 %s158, %s156
        %s160 = smul.addr %s159, 4
        %s161 = scalar_lea.vmem %s0, %s160
      $region20: #{_lambda_.16} parent=15 // pred_fallthru
        _
      // Predicated region
      $region21: #{_lambda_.16} parent=15 // pred_check
        %p162 = pneg %p71
      $region22: #{_lambda_.16} parent=15 // pred_check_branch
        %164 = sbr.rel (%p162) target = $region24
      $region23: #{_lambda_.16} parent=15 // pred_region
        %p165 = scmp.lt.s32.totalorder %s16, 1
        %s166 = scalar_select %p165, %s16, 1
        %p167 = scmp.lt.s32.totalorder %s17, 0
        %s168 = scalar_select %p167, %s17, 0
        %s169 = sadd.s32 %s168, %s166
        %s170 = smul.addr %s169, 4
        %s171 = scalar_lea.vmem %s1, %s170
      $region24: #{_lambda_.16} parent=15 // pred_fallthru
        _
      // Predicated region
      $region25: #{_lambda_.16} parent=15 // pred_check
        %p172 = pneg %p99
      $region26: #{_lambda_.16} parent=15 // pred_check_branch
        %174 = sbr.rel (%p172) target = $region28
      $region27: #{_lambda_.16} parent=15 // pred_region
        %p175 = scmp.lt.s32.totalorder %s16, 1
        %s176 = scalar_select %p175, %s16, 1
        %p177 = scmp.lt.s32.totalorder %s17, 0
        %s178 = scalar_select %p177, %s17, 0
        %s179 = sadd.s32 %s178, %s176
        %s180 = smul.addr %s179, 4
        %s181 = scalar_lea.vmem %s2, %s180
      $region28: #{_lambda_.16} parent=15 // pred_fallthru
        _
    $region16: #{_lambda_.16} parent=5 // pred_fallthru
      _
    %p182 = scmp.le.s32.totalorder 1, %s9
    %p183 = scmp.lt.s32.totalorder %s9, 3
    %p184 = pnand %p182, %p183
    %p185 = pneg %p184
    // Predicated region
    $region29: #{_lambda_.16} parent=5 // pred_check
      _
    $region30: #{_lambda_.16} parent=5 // pred_check_branch
      %187 = sbr.rel (%p184) target = $region32
    $region31: #{_lambda_.16} parent=5 // pred_region
      %s188 = ssub.s32 %s9, 1
      %p189 = scmp.lt.s32.totalorder %s18, 1
      %s190 = scalar_select %p189, %s18, 1
      %p191 = scmp.lt.s32.totalorder %s19, 0
      %s192 = scalar_select %p191, %s19, 0
      %s193 = sadd.s32 %s192, %s190
      %s194 = smul.addr %s193, 4
      %s195 = scalar_lea.vmem %s0, %s194
      %p196 = pneg %p49
      %p197 = pneg %p46
      %p198 = scmp.lt.s32.totalorder %s18, 1
      %s199 = scalar_select %p198, %s18, 1
      %p200 = scmp.lt.s32.totalorder %s19, 0
      %s201 = scalar_select %p200, %s19, 0
      %s202 = sadd.s32 %s201, %s199
      %s203 = smul.addr %s202, 4
      %s204 = scalar_lea.vmem %s1, %s203
      %p205 = pneg %p77
      %p206 = pneg %p74
      %p207 = scmp.lt.s32.totalorder %s18, 1
      %s208 = scalar_select %p207, %s18, 1
      %p209 = scmp.lt.s32.totalorder %s19, 0
      %s210 = scalar_select %p209, %s19, 0
      %s211 = sadd.s32 %s210, %s208
      %s212 = smul.addr %s211, 4
      %s213 = scalar_lea.vmem %s2, %s212
      %p214 = pneg %p105
      %p215 = pneg %p102
      %p216 = pneg %p133
      %p217 = pneg %p130
      %p218 = scmp.lt.s32.totalorder %s18, 1
      %s219 = scalar_select %p218, %s18, 1
      %p220 = scmp.lt.s32.totalorder %s19, 0
      %s221 = scalar_select %p220, %s19, 0
      %s222 = sadd.s32 %s221, %s219
      %s223 = smul.addr %s222, 4
      %s224 = scalar_lea.vmem %s3, %s223
      %p225 = scmp.lt.s32.totalorder %s18, 1
      %s226 = scalar_select %p225, %s18, 1
      %p227 = scmp.lt.s32.totalorder %s19, 0
      %s228 = scalar_select %p227, %s19, 0
      %s229 = sadd.s32 %s228, %s226
      %s230 = smul.addr %s229, 4
      %s231 = scalar_lea.vmem %s0, %s230
      %p232 = scmp.lt.s32.totalorder %s18, 1
      %s233 = scalar_select %p232, %s18, 1
      %p234 = scmp.lt.s32.totalorder %s19, 0
      %s235 = scalar_select %p234, %s19, 0
      %s236 = sadd.s32 %s235, %s233
      %s237 = smul.addr %s236, 4
      %s238 = scalar_lea.vmem %s1, %s237
      %p239 = scmp.lt.s32.totalorder %s18, 1
      %s240 = scalar_select %p239, %s18, 1
      %p241 = scmp.lt.s32.totalorder %s19, 0
      %s242 = scalar_select %p241, %s19, 0
      %s243 = sadd.s32 %s242, %s240
      %s244 = smul.addr %s243, 4
      %s245 = scalar_lea.vmem %s2, %s244
      %p246 = scmp.lt.s32.totalorder %s18, 1
      %s247 = scalar_select %p246, %s18, 1
      %p248 = scmp.lt.s32.totalorder %s19, 0
      %s249 = scalar_select %p248, %s19, 0
      %s250 = sadd.s32 %s249, %s247
      %s251 = smul.addr %s250, 4
      %s252 = scalar_lea.vmem %s3, %s251
      %v254 = vld [vmem:[%s231] sm:$0x7]
      %v255 = vunpack.c.l.bf16 %v254
      %v256 = vmul.f32 %v255, 0.25
      %v257 = vpack.c.bf16 %v256, %v256
      %v258 = vld [vmem:[%s238] sm:$0x7]
      %v259 = vld [vmem:[%s245] sm:$0x7]
      %vm260 = vcmask 130048
      %v262 = vsel %vm260, %v257, 0
      %v265 = vsel %vm260, %v258, 0
      %267 = vmatprep.subr.bf16.mxu0 0
      %268 = vmatpush1.bf16.xpose.msra.mxu0 %v265
      %269 = vmatprep.subr.bf16.mxu0 0
      %270 = vmatpush1.bf16.xpose.msra.mxu0 0
      %271 = vmatprep.subr.bf16.mxu0 0
      %272 = vmatpush1.bf16.xpose.msra.mxu0 0
      %273 = vmatprep.subr.bf16.mxu0 0
      %274 = vmatpush1.bf16.xpose.msra.mxu0 0
      %275 = vmatprep.subr.bf16.mxu0 0
      %276 = vmatpush1.bf16.xpose.msra.mxu0 0
      %277 = vmatprep.subr.bf16.mxu0 0
      %278 = vmatpush1.bf16.xpose.msra.mxu0 0
      %279 = vmatprep.subr.bf16.mxu0 0
      %280 = vmatpush1.bf16.xpose.msra.mxu0 0
      %281 = vmatprep.subr.bf16.mxu0 0
      %282 = vmatpush1.bf16.xpose.msra.mxu0 0
      %283 = vmatprep.subr.bf16.mxu0 0
      %284 = vmatpush1.bf16.xpose.msra.mxu0 0
      %285 = vmatprep.subr.bf16.mxu0 0
      %286 = vmatpush1.bf16.xpose.msra.mxu0 0
      %287 = vmatprep.subr.bf16.mxu0 0
      %288 = vmatpush1.bf16.xpose.msra.mxu0 0
      %289 = vmatprep.subr.bf16.mxu0 0
      %290 = vmatpush1.bf16.xpose.msra.mxu0 0
      %291 = vmatprep.subr.bf16.mxu0 0
      %292 = vmatpush1.bf16.xpose.msra.mxu0 0
      %293 = vmatprep.subr.bf16.mxu0 0
      %294 = vmatpush1.bf16.xpose.msra.mxu0 0
      %295 = vmatprep.subr.bf16.mxu0 0
      %296 = vmatpush1.bf16.xpose.msra.mxu0 0
      %297 = vmatprep.subr.bf16.mxu0 0
      %298 = vmatpush1.bf16.xpose.msra.mxu0 0
      %299 = vmatprep.mubr.bf16.mxu0 0
      %300 = vmatmul.mubr.bf16.gmra.mrb[0].mxu0 %v262
      %v301 = vpop.f32.mrb[0].mxu0
      %v302 = vadd.f32 0.0, %v301
      %v303 = vpop.f32.mrb[0].mxu0
      %v304 = vpop.f32.mrb[0].mxu0
      %v305 = vpop.f32.mrb[0].mxu0
      %306 = vdwg.mxu0
      %vm307 = vcmask 36864
      %v308 = vsel %vm307, %v302, -inf
      %309 = vmax.xlane.f32.xlu0 %v308
      %v310 = vpop.xlane.xlu0 %309
      %v311 = vsub.f32 %v302, %v310
      %v312 = vmul.f32 %v311, 1.442695
      %v313 = vpow.pop %v312
      %v314 = vsel %vm307, %v313, 0.0
      %315 = vadd.xlane.f32.xlu0 %v314
      %v316 = vpop.xlane.xlu0 %315
      %v317 = vpack.c.bf16 %v313, %v313
      %vm318 = vcmask 39936
      %v320 = vsel %vm318, %v317, 0
      %vm322 = vcmask 1041408
      %vm323 = vcmask 1042432
      %v324 = vsel %vm322, 4294967295, 65535
      %v325 = vsel %vm323, %v324, 0
      %v327 = vand.u32 %v259, %v325
      %329 = vmatprep.subr.bf16.mxu0 0
      %330 = vmatpush1.bf16.msra.mxu0 %v327
      %331 = vmatprep.subr.bf16.mxu0 0
      %332 = vmatpush1.bf16.msra.mxu0 0
      %333 = vmatprep.subr.bf16.mxu0 0
      %334 = vmatpush1.bf16.msra.mxu0 0
      %335 = vmatprep.subr.bf16.mxu0 0
      %336 = vmatpush1.bf16.msra.mxu0 0
      %337 = vmatprep.subr.bf16.mxu0 0
      %338 = vmatpush1.bf16.msra.mxu0 0
      %339 = vmatprep.subr.bf16.mxu0 0
      %340 = vmatpush1.bf16.msra.mxu0 0
      %341 = vmatprep.subr.bf16.mxu0 0
      %342 = vmatpush1.bf16.msra.mxu0 0
      %343 = vmatprep.subr.bf16.mxu0 0
      %344 = vmatpush1.bf16.msra.mxu0 0
      %345 = vmatprep.subr.bf16.mxu0 0
      %346 = vmatpush1.bf16.msra.mxu0 0
      %347 = vmatprep.subr.bf16.mxu0 0
      %348 = vmatpush1.bf16.msra.mxu0 0
      %349 = vmatprep.subr.bf16.mxu0 0
      %350 = vmatpush1.bf16.msra.mxu0 0
      %351 = vmatprep.subr.bf16.mxu0 0
      %352 = vmatpush1.bf16.msra.mxu0 0
      %353 = vmatprep.subr.bf16.mxu0 0
      %354 = vmatpush1.bf16.msra.mxu0 0
      %355 = vmatprep.subr.bf16.mxu0 0
      %356 = vmatpush1.bf16.msra.mxu0 0
      %357 = vmatprep.subr.bf16.mxu0 0
      %358 = vmatpush1.bf16.msra.mxu0 0
      %359 = vmatprep.subr.bf16.mxu0 0
      %360 = vmatpush1.bf16.msra.mxu0 0
      %361 = vmatprep.mubr.bf16.mxu0 0
      %362 = vmatmul.mubr.bf16.gmra.mrb[0].mxu0 %v320
      %v363 = vpop.f32.mrb[0].mxu0
      %v364 = vadd.f32 0.0, %v363
      %v365 = vpop.f32.mrb[0].mxu0
      %v366 = vpop.f32.mrb[0].mxu0
      %v367 = vpop.f32.mrb[0].mxu0
      %368 = vdwg.mxu0
      %v369 = vrcp.pop %v316
      %v370 = vmul.f32 %v364, %v369
      %372 = vrot.lane.b32.xlu0 %v257, 112
      %v373 = vpop.permute.xlu0 %372
      %v375 = vunpack.c.l.b16 %v258
      %v376 = vpack.c.b16 %v375, %v375
      %377 = vrot.lane.b32.xlu0 %v376, 112
      %v378 = vpop.permute.xlu0 %377
      %v380 = vsel %vm260, %v373, 0
      %v383 = vsel %vm260, %v378, 0
      %385 = vmatprep.subr.bf16.mxu0 0
      %386 = vmatpush1.bf16.xpose.msra.mxu0 %v383
      %387 = vmatprep.subr.bf16.mxu0 0
      %388 = vmatpush1.bf16.xpose.msra.mxu0 0
      %389 = vmatprep.subr.bf16.mxu0 0
      %390 = vmatpush1.bf16.xpose.msra.mxu0 0
      %391 = vmatprep.subr.bf16.mxu0 0
      %392 = vmatpush1.bf16.xpose.msra.mxu0 0
      %393 = vmatprep.subr.bf16.mxu0 0
      %394 = vmatpush1.bf16.xpose.msra.mxu0 0
      %395 = vmatprep.subr.bf16.mxu0 0
      %396 = vmatpush1.bf16.xpose.msra.mxu0 0
      %397 = vmatprep.subr.bf16.mxu0 0
      %398 = vmatpush1.bf16.xpose.msra.mxu0 0
      %399 = vmatprep.subr.bf16.mxu0 0
      %400 = vmatpush1.bf16.xpose.msra.mxu0 0
      %401 = vmatprep.subr.bf16.mxu0 0
      %402 = vmatpush1.bf16.xpose.msra.mxu0 0
      %403 = vmatprep.subr.bf16.mxu0 0
      %404 = vmatpush1.bf16.xpose.msra.mxu0 0
      %405 = vmatprep.subr.bf16.mxu0 0
      %406 = vmatpush1.bf16.xpose.msra.mxu0 0
      %407 = vmatprep.subr.bf16.mxu0 0
      %408 = vmatpush1.bf16.xpose.msra.mxu0 0
      %409 = vmatprep.subr.bf16.mxu0 0
      %410 = vmatpush1.bf16.xpose.msra.mxu0 0
      %411 = vmatprep.subr.bf16.mxu0 0
      %412 = vmatpush1.bf16.xpose.msra.mxu0 0
      %413 = vmatprep.subr.bf16.mxu0 0
      %414 = vmatpush1.bf16.xpose.msra.mxu0 0
      %415 = vmatprep.subr.bf16.mxu0 0
      %416 = vmatpush1.bf16.xpose.msra.mxu0 0
      %417 = vmatprep.mubr.bf16.mxu0 0
      %418 = vmatmul.mubr.bf16.gmra.mrb[0].mxu0 %v380
      %v419 = vpop.f32.mrb[0].mxu0
      %v420 = vadd.f32 0.0, %v419
      %v421 = vpop.f32.mrb[0].mxu0
      %v422 = vpop.f32.mrb[0].mxu0
      %v423 = vpop.f32.mrb[0].mxu0
      %424 = vdwg.mxu0
      %v425 = vsel %vm307, %v420, -inf
      %426 = vmax.xlane.f32.xlu0 %v425
      %v427 = vpop.xlane.xlu0 %426
      %v428 = vsub.f32 %v420, %v427
      %v429 = vmul.f32 %v428, 1.442695
      %v430 = vpow.pop %v429
      %v431 = vsel %vm307, %v430, 0.0
      %432 = vadd.xlane.f32.xlu0 %v431
      %v433 = vpop.xlane.xlu0 %432
      %v434 = vpack.c.bf16 %v430, %v430
      %v436 = vunpack.c.l.b16 %v259
      %v437 = vpack.c.b16 %v436, %v436
      %438 = vrot.lane.b32.xlu0 %v437, 112
      %v439 = vpop.permute.xlu0 %438
      %v441 = vsel %vm318, %v434, 0
      %v444 = vand.u32 %v439, %v325
      %446 = vmatprep.subr.bf16.mxu0 0
      %447 = vmatpush1.bf16.msra.mxu0 %v444
      %448 = vmatprep.subr.bf16.mxu0 0
      %449 = vmatpush1.bf16.msra.mxu0 0
      %450 = vmatprep.subr.bf16.mxu0 0
      %451 = vmatpush1.bf16.msra.mxu0 0
      %452 = vmatprep.subr.bf16.mxu0 0
      %453 = vmatpush1.bf16.msra.mxu0 0
      %454 = vmatprep.subr.bf16.mxu0 0
      %455 = vmatpush1.bf16.msra.mxu0 0
      %456 = vmatprep.subr.bf16.mxu0 0
      %457 = vmatpush1.bf16.msra.mxu0 0
      %458 = vmatprep.subr.bf16.mxu0 0
      %459 = vmatpush1.bf16.msra.mxu0 0
      %460 = vmatprep.subr.bf16.mxu0 0
      %461 = vmatpush1.bf16.msra.mxu0 0
      %462 = vmatprep.subr.bf16.mxu0 0
      %463 = vmatpush1.bf16.msra.mxu0 0
      %464 = vmatprep.subr.bf16.mxu0 0
      %465 = vmatpush1.bf16.msra.mxu0 0
      %466 = vmatprep.subr.bf16.mxu0 0
      %467 = vmatpush1.bf16.msra.mxu0 0
      %468 = vmatprep.subr.bf16.mxu0 0
      %469 = vmatpush1.bf16.msra.mxu0 0
      %470 = vmatprep.subr.bf16.mxu0 0
      %471 = vmatpush1.bf16.msra.mxu0 0
      %472 = vmatprep.subr.bf16.mxu0 0
      %473 = vmatpush1.bf16.msra.mxu0 0
      %474 = vmatprep.subr.bf16.mxu0 0
      %475 = vmatpush1.bf16.msra.mxu0 0
      %476 = vmatprep.subr.bf16.mxu0 0
      %477 = vmatpush1.bf16.msra.mxu0 0
      %478 = vmatprep.mubr.bf16.mxu0 0
      %479 = vmatmul.mubr.bf16.gmra.mrb[0].mxu0 %v441
      %v480 = vpop.f32.mrb[0].mxu0
      %v481 = vadd.f32 0.0, %v480
      %v482 = vpop.f32.mrb[0].mxu0
      %v483 = vpop.f32.mrb[0].mxu0
      %v484 = vpop.f32.mrb[0].mxu0
      %485 = vdwg.mxu0
      %v486 = vrcp.pop %v433
      %v487 = vmul.f32 %v481, %v486
      %489 = vrot.lane.b32.xlu0 %v487, 16
      %v490 = vpop.permute.xlu0 %489
      %v492 = vsel %vm260, %v370, %v490
      %v493 = vpack.c.bf16 %v492, %v492
      %vm494 = vcmask 256000
      %vm495 = vsmask.f32 2304
      %vm496 = vmand %vm494, %vm495
      %v497 = vld [vmem:[%s252] sm:$0x7]
      %v498 = vsel %vm496, %v493, %v497
      %499 = vst [vmem:[%s252] sm:$0x7] %v498
      %p500 = scmp.lt.s32.totalorder %s18, 1
      %s501 = scalar_select %p500, %s18, 1
      %p502 = scmp.lt.s32.totalorder %s19, 0
      %s503 = scalar_select %p502, %s19, 0
      %s504 = sadd.s32 %s503, %s501
      %s505 = smul.addr %s504, 4
      %s506 = scalar_lea.vmem %s3, %s505
      // Predicated region
      $region33: #{_lambda_.16} parent=31 // pred_check
        %p507 = pneg %p130
      $region34: #{_lambda_.16} parent=31 // pred_check_branch
        %509 = sbr.rel (%p507) target = $region36
      $region35: #{_lambda_.16} parent=31 // pred_region
        _
      $region36: #{_lambda_.16} parent=31 // pred_fallthru
        _
    $region32: #{_lambda_.16} parent=5 // pred_fallthru
      _
    %p510 = scmp.le.s32.totalorder 2, %s9
    // Predicated region
    $region37: #{_lambda_.16} parent=5 // pred_check
      %p511 = pneg %p510
    $region38: #{_lambda_.16} parent=5 // pred_check_branch
      %513 = sbr.rel (%p511) target = $region40
    $region39: #{_lambda_.16} parent=5 // pred_region
      %s514 = ssub.s32 %s9, 2
      // Predicated region
      $region41: #{_lambda_.16} parent=39 // pred_check
        %p515 = pneg %p136
      $region42: #{_lambda_.16} parent=39 // pred_check_branch
        %517 = sbr.rel (%p515) target = $region44
      $region43: #{_lambda_.16} parent=39 // pred_region
        %p518 = scmp.lt.s32.totalorder %s20, 1
        %s519 = scalar_select %p518, %s20, 1
        %p520 = scmp.lt.s32.totalorder %s21, 0
        %s521 = scalar_select %p520, %s21, 0
        %s522 = sadd.s32 %s521, %s519
        %s523 = smul.addr %s522, 4
        %s524 = scalar_lea.vmem %s3, %s523
      $region44: #{_lambda_.16} parent=39 // pred_fallthru
        _
    $region40: #{_lambda_.16} parent=5 // pred_fallthru
      _
  $region6: #{_lambda_.16} parent=0 // loop_footer
    %s13 = sadd.s32 1, %s9
  $region7: #{_lambda_.16} parent=0 // loop_footer_branch
    %8 = sbr.rel target = $region3
  $region8: #{_lambda_.16} parent=0 // loop_exit
    _

// kernel: _lambda_.17
$region0: #{_lambda_.17}
  #allocation0 [shape = 'u32[]', space=smem, size = 0x4, offset = 0x4, fixed_abs, tag = 'smem constant byte address 0x4 - core index']
  #allocation1 [shape = 'u32[144,128]{1,0:T(1,128)}', space=vmem, size = 0x12000, scoped, tag = 'internal scratch']
  #allocation2 [shape = 'f32[16,32]{1,0:T(8,128)}', space=vmem, size = 0x2000, scoped, tag = 'scratch operand']
  %s0 = inlined_call_operand.vmem [shape: bf16[16,32], index: 0, kind: input, shape index: {}]
  %s1 = inlined_call_operand.vmem [shape: bf16[32,32], index: 1, kind: input, shape index: {}]
  %s2 = inlined_call_operand.vmem [shape: f32[1,32], index: 2, kind: input, shape index: {}]
  %s3 = inlined_call_operand.vmem [shape: f32[16,32], index: 3, kind: input, shape index: {}]
  %s4 = inlined_call_operand.vmem [shape: f32[16,32], index: 4, kind: output, shape index: {}]
  %s5 = sld [smem:[#allocation0]]
  $region34: #{_lambda_.17} parent=0
    _
  %s7 = ssub.s32 1, %s5
  %s8 = scalar_select 0, %s7, %s5
  // Predicated region
  $region2: #{_lambda_.17} parent=0 // pred_check
    _
  $region3: #{_lambda_.17} parent=0 // pred_check_branch
    %10 = sbr.rel (0) target = $region5
  $region4: #{_lambda_.17} parent=0 // pred_region
    _
  $region5: #{_lambda_.17} parent=0 // pred_fallthru
    _
  // Predicated region
  $region6: #{_lambda_.17} parent=0 // pred_check
    _
  $region7: #{_lambda_.17} parent=0 // pred_check_branch
    %12 = sbr.rel (0) target = $region9
  $region8: #{_lambda_.17} parent=0 // pred_region
    _
  $region9: #{_lambda_.17} parent=0 // pred_fallthru
    _
  // Predicated region
  $region10: #{_lambda_.17} parent=0 // pred_check
    _
  $region11: #{_lambda_.17} parent=0 // pred_check_branch
    %14 = sbr.rel (0) target = $region13
  $region12: #{_lambda_.17} parent=0 // pred_region
    _
  $region13: #{_lambda_.17} parent=0 // pred_fallthru
    _
  // Predicated region
  $region14: #{_lambda_.17} parent=0 // pred_check
    _
  $region15: #{_lambda_.17} parent=0 // pred_check_branch
    %16 = sbr.rel (0) target = $region17
  $region16: #{_lambda_.17} parent=0 // pred_region
    _
  $region17: #{_lambda_.17} parent=0 // pred_fallthru
    _
  %p18 = scmp.eq.s32.totalorder 0, 0
  // Predicated region
  $region18: #{_lambda_.17} parent=0 // pred_check
    %p19 = pneg %p18
  $region19: #{_lambda_.17} parent=0 // pred_check_branch
    %21 = sbr.rel (%p19) target = $region21
  $region20: #{_lambda_.17} parent=0 // pred_region
    %vm22 = vcmask 261120
    %23 = vst.msk [vmem:[#allocation2] sm:$0xff] %vm22, 0.0
    %24 = vst.msk [vmem:[#allocation2 + $0x8] sm:$0xff] %vm22, 0.0
  $region21: #{_lambda_.17} parent=0 // pred_fallthru
    _
  %v25 = vld [vmem:[%s0] sm:$0xf]
  %v26 = vld [vmem:[%s0 + $0x4] sm:$0xf]
  %v27 = vld [vmem:[#allocation2] sm:$0xff]
  %v28 = vld [vmem:[#allocation2 + $0x8] sm:$0xff]
  %v29 = vld [vmem:[%s1] sm:$0xf]
  %v30 = vld [vmem:[%s1 + $0x4] sm:$0xf]
  %v31 = vld [vmem:[%s1 + $0x8] sm:$0xf]
  %v32 = vld [vmem:[%s1 + $0xc] sm:$0xf]
  %v35 = vunpack.c.l.b16 %v25
  %v36 = vunpack.c.l.b16 %v26
  %v37 = vpack.c.b16 %v36, %v35
  %v42 = vunpack.c.l.b16 %v29
  %v43 = vunpack.c.l.b16 %v30
  %v44 = vunpack.c.l.b16 %v31
  %v45 = vunpack.c.l.b16 %v32
  %v46 = vpack.c.b16 %v43, %v42
  %v47 = vpack.c.b16 %v45, %v44
  %vm50 = vcmask 261120
  %v52 = vsel %vm50, %v37, 0
  %54 = vmatprep.subr.bf16.mxu0 0
  %55 = vmatpush1.bf16.msra.mxu0 %v46
  %56 = vmatprep.subr.bf16.mxu0 0
  %57 = vmatpush1.bf16.msra.mxu0 %v47
  %58 = vmatprep.subr.bf16.mxu0 0
  %59 = vmatpush1.bf16.msra.mxu0 0
  %60 = vmatprep.subr.bf16.mxu0 0
  %61 = vmatpush1.bf16.msra.mxu0 0
  %62 = vmatprep.subr.bf16.mxu0 0
  %63 = vmatpush1.bf16.msra.mxu0 0
  %64 = vmatprep.subr.bf16.mxu0 0
  %65 = vmatpush1.bf16.msra.mxu0 0
  %66 = vmatprep.subr.bf16.mxu0 0
  %67 = vmatpush1.bf16.msra.mxu0 0
  %68 = vmatprep.subr.bf16.mxu0 0
  %69 = vmatpush1.bf16.msra.mxu0 0
  %70 = vmatprep.subr.bf16.mxu0 0
  %71 = vmatpush1.bf16.msra.mxu0 0
  %72 = vmatprep.subr.bf16.mxu0 0
  %73 = vmatpush1.bf16.msra.mxu0 0
  %74 = vmatprep.subr.bf16.mxu0 0
  %75 = vmatpush1.bf16.msra.mxu0 0
  %76 = vmatprep.subr.bf16.mxu0 0
  %77 = vmatpush1.bf16.msra.mxu0 0
  %78 = vmatprep.subr.bf16.mxu0 0
  %79 = vmatpush1.bf16.msra.mxu0 0
  %80 = vmatprep.subr.bf16.mxu0 0
  %81 = vmatpush1.bf16.msra.mxu0 0
  %82 = vmatprep.subr.bf16.mxu0 0
  %83 = vmatpush1.bf16.msra.mxu0 0
  %84 = vmatprep.subr.bf16.mxu0 0
  %85 = vmatpush1.bf16.msra.mxu0 0
  %86 = vmatprep.mubr.bf16.mxu0 0
  %87 = vmatmul.mubr.bf16.gmra.mrb[0].mxu0 %v52
  %v88 = vpop.f32.mrb[0].mxu0
  %v89 = vadd.f32 0.0, %v88
  %v90 = vpop.f32.mrb[0].mxu0
  %v91 = vpop.f32.mrb[0].mxu0
  %v92 = vadd.f32 0.0, %v91
  %v93 = vpop.f32.mrb[0].mxu0
  %94 = vdwg.mxu0
  %v95 = vadd.f32 %v27, %v89
  %v96 = vadd.f32 %v28, %v92
  %97 = vst.msk [vmem:[#allocation2] sm:$0xff] %vm50, %v95
  %98 = vst.msk [vmem:[#allocation2 + $0x8] sm:$0xff] %vm50, %v96
  // Predicated region
  $region22: #{_lambda_.17} parent=0 // pred_check
    %p99 = pneg %p18
  $region23: #{_lambda_.17} parent=0 // pred_check_branch
    %101 = sbr.rel (%p99) target = $region25
  $region24: #{_lambda_.17} parent=0 // pred_region
    %v102 = vld [vmem:[#allocation2] sm:$0xff]
    %v103 = vld [vmem:[#allocation2 + $0x8] sm:$0xff]
    %v104 = vld [vmem:[%s2] sm:$0x1]
    %v106 = vlaneseq
    %v107 = vshrl.u32 %v106, 7
    %v108 = vsub.s32 0, %v107
    %v109 = vrot.slane %v104, %v108
    %v111 = vadd.f32 %v102, %v109
    %v112 = vadd.f32 %v103, %v109
    %v113 = vld [vmem:[%s3] sm:$0xff]
    %v114 = vld [vmem:[%s3 + $0x8] sm:$0xff]
    %v115 = vadd.f32 %v111, %v113
    %v116 = vadd.f32 %v112, %v114
    %117 = vst.msk [vmem:[%s4] sm:$0xff] %vm50, %v115
    %118 = vst.msk [vmem:[%s4 + $0x8] sm:$0xff] %vm50, %v116
  $region25: #{_lambda_.17} parent=0 // pred_fallthru
    _
  // Predicated region
  $region26: #{_lambda_.17} parent=0 // pred_check
    _
  $region27: #{_lambda_.17} parent=0 // pred_check_branch
    %120 = sbr.rel (0) target = $region29
  $region28: #{_lambda_.17} parent=0 // pred_region
    _
  $region29: #{_lambda_.17} parent=0 // pred_fallthru
    _
  // Predicated region
  $region30: #{_lambda_.17} parent=0 // pred_check
    _
  $region31: #{_lambda_.17} parent=0 // pred_check_branch
    %122 = sbr.rel (0) target = $region33
  $region32: #{_lambda_.17} parent=0 // pred_region
    _
  $region33: #{_lambda_.17} parent=0 // pred_fallthru
    _

// kernel: _lambda_.18
$region0: #{_lambda_.18}
  #allocation0 [shape = 'u32[]', space=smem, size = 0x4, offset = 0x4, fixed_abs, tag = 'smem constant byte address 0x4 - core index']
  #allocation1 [shape = 'u32[144,128]{1,0:T(1,128)}', space=vmem, size = 0x12000, scoped, tag = 'internal scratch']
  #allocation2 [shape = 'f32[16,128]{1,0:T(8,128)}', space=vmem, size = 0x2000, scoped, tag = 'scratch operand']
  %s0 = inlined_call_operand.vmem [shape: f32[16,32], index: 0, kind: input, shape index: {}]
  %s1 = inlined_call_operand.vmem [shape: bf16[32,128], index: 1, kind: input, shape index: {}]
  %s2 = inlined_call_operand.vmem [shape: f32[1,128], index: 2, kind: input, shape index: {}]
  %s3 = inlined_call_operand.vmem [shape: f32[1,32], index: 3, kind: input, shape index: {}]
  %s4 = inlined_call_operand.vmem [shape: f32[1,32], index: 4, kind: input, shape index: {}]
  %s5 = inlined_call_operand.vmem [shape: bf16[16,128], index: 5, kind: output, shape index: {}]
  %s6 = sld [smem:[#allocation0]]
  $region38: #{_lambda_.18} parent=0
    _
  %s8 = ssub.s32 1, %s6
  %s9 = scalar_select 0, %s8, %s6
  // Predicated region
  $region2: #{_lambda_.18} parent=0 // pred_check
    _
  $region3: #{_lambda_.18} parent=0 // pred_check_branch
    %11 = sbr.rel (0) target = $region5
  $region4: #{_lambda_.18} parent=0 // pred_region
    _
  $region5: #{_lambda_.18} parent=0 // pred_fallthru
    _
  // Predicated region
  $region6: #{_lambda_.18} parent=0 // pred_check
    _
  $region7: #{_lambda_.18} parent=0 // pred_check_branch
    %13 = sbr.rel (0) target = $region9
  $region8: #{_lambda_.18} parent=0 // pred_region
    _
  $region9: #{_lambda_.18} parent=0 // pred_fallthru
    _
  // Predicated region
  $region10: #{_lambda_.18} parent=0 // pred_check
    _
  $region11: #{_lambda_.18} parent=0 // pred_check_branch
    %15 = sbr.rel (0) target = $region13
  $region12: #{_lambda_.18} parent=0 // pred_region
    _
  $region13: #{_lambda_.18} parent=0 // pred_fallthru
    _
  // Predicated region
  $region14: #{_lambda_.18} parent=0 // pred_check
    _
  $region15: #{_lambda_.18} parent=0 // pred_check_branch
    %17 = sbr.rel (0) target = $region17
  $region16: #{_lambda_.18} parent=0 // pred_region
    _
  $region17: #{_lambda_.18} parent=0 // pred_fallthru
    _
  // Predicated region
  $region18: #{_lambda_.18} parent=0 // pred_check
    _
  $region19: #{_lambda_.18} parent=0 // pred_check_branch
    %19 = sbr.rel (0) target = $region21
  $region20: #{_lambda_.18} parent=0 // pred_region
    _
  $region21: #{_lambda_.18} parent=0 // pred_fallthru
    _
  %p21 = scmp.eq.s32.totalorder 0, 0
  // Predicated region
  $region22: #{_lambda_.18} parent=0 // pred_check
    %p22 = pneg %p21
  $region23: #{_lambda_.18} parent=0 // pred_check_branch
    %24 = sbr.rel (%p22) target = $region25
  $region24: #{_lambda_.18} parent=0 // pred_region
    %25 = vst [vmem:[#allocation2] sm:$0xff] 0.0
    %26 = vst [vmem:[#allocation2 + $0x8] sm:$0xff] 0.0
  $region25: #{_lambda_.18} parent=0 // pred_fallthru
    _
  %v27 = vld [vmem:[%s0] sm:$0xff]
  %v28 = vld [vmem:[%s0 + $0x8] sm:$0xff]
  %vm29 = vcmask 261120
  %v30 = vsel %vm29, %v27, 0.0
  %31 = vadd.xlane.f32.xlu0 %v30
  %v32 = vpop.xlane.xlu0 %31
  %v33 = vsel %vm29, %v28, 0.0
  %34 = vadd.xlane.f32.xlu0 %v33
  %v35 = vpop.xlane.xlu0 %34
  %v36 = vrcp.pop 32.0
  %v37 = vmul.f32 %v32, %v36
  %v38 = vmul.f32 %v35, %v36
  %v39 = vsub.f32 %v27, %v37
  %v40 = vsub.f32 %v28, %v38
  %v41 = vmul.f32 %v39, %v39
  %v42 = vmul.f32 %v40, %v40
  %v43 = vsel %vm29, %v41, 0.0
  %44 = vadd.xlane.f32.xlu0 %v43
  %v45 = vpop.xlane.xlu0 %44
  %v46 = vsel %vm29, %v42, 0.0
  %47 = vadd.xlane.f32.xlu0 %v46
  %v48 = vpop.xlane.xlu0 %47
  %v49 = vmul.f32 %v45, %v36
  %v50 = vmul.f32 %v48, %v36
  %v51 = vadd.f32 %v49, 1e-05
  %v52 = vadd.f32 %v50, 1e-05
  %v53 = vrsqrt.pop %v51
  %v54 = vrsqrt.pop %v52
  %v55 = vmul.f32 %v39, %v53
  %v56 = vmul.f32 %v40, %v54
  %v57 = vld [vmem:[%s3] sm:$0x1]
  %v59 = vlaneseq
  %v60 = vshrl.u32 %v59, 7
  %v61 = vsub.s32 0, %v60
  %v62 = vrot.slane %v57, %v61
  %v64 = vmul.f32 %v55, %v62
  %v65 = vmul.f32 %v56, %v62
  %v66 = vld [vmem:[%s4] sm:$0x1]
  %v68 = vlaneseq
  %v69 = vshrl.u32 %v68, 7
  %v70 = vsub.s32 0, %v69
  %v71 = vrot.slane %v66, %v70
  %v73 = vadd.f32 %v64, %v71
  %v74 = vadd.f32 %v65, %v71
  %v75 = vpack.c.bf16 %v74, %v73
  %v76 = vld [vmem:[#allocation2] sm:$0xff]
  %v77 = vld [vmem:[#allocation2 + $0x8] sm:$0xff]
  %v78 = vld [vmem:[%s1] sm:$0xf]
  %v79 = vld [vmem:[%s1 + $0x4] sm:$0xf]
  %v80 = vld [vmem:[%s1 + $0x8] sm:$0xf]
  %v81 = vld [vmem:[%s1 + $0xc] sm:$0xf]
  %v86 = vunpack.c.l.b16 %v78
  %v87 = vunpack.c.l.b16 %v79
  %v88 = vunpack.c.l.b16 %v80
  %v89 = vunpack.c.l.b16 %v81
  %v90 = vpack.c.b16 %v87, %v86
  %v91 = vpack.c.b16 %v89, %v88
  %v95 = vsel %vm29, %v75, 0
  %97 = vmatprep.subr.bf16.mxu0 0
  %98 = vmatpush1.bf16.msra.mxu0 %v90
  %99 = vmatprep.subr.bf16.mxu0 0
  %100 = vmatpush1.bf16.msra.mxu0 %v91
  %101 = vmatprep.subr.bf16.mxu0 0
  %102 = vmatpush1.bf16.msra.mxu0 0
  %103 = vmatprep.subr.bf16.mxu0 0
  %104 = vmatpush1.bf16.msra.mxu0 0
  %105 = vmatprep.subr.bf16.mxu0 0
  %106 = vmatpush1.bf16.msra.mxu0 0
  %107 = vmatprep.subr.bf16.mxu0 0
  %108 = vmatpush1.bf16.msra.mxu0 0
  %109 = vmatprep.subr.bf16.mxu0 0
  %110 = vmatpush1.bf16.msra.mxu0 0
  %111 = vmatprep.subr.bf16.mxu0 0
  %112 = vmatpush1.bf16.msra.mxu0 0
  %113 = vmatprep.subr.bf16.mxu0 0
  %114 = vmatpush1.bf16.msra.mxu0 0
  %115 = vmatprep.subr.bf16.mxu0 0
  %116 = vmatpush1.bf16.msra.mxu0 0
  %117 = vmatprep.subr.bf16.mxu0 0
  %118 = vmatpush1.bf16.msra.mxu0 0
  %119 = vmatprep.subr.bf16.mxu0 0
  %120 = vmatpush1.bf16.msra.mxu0 0
  %121 = vmatprep.subr.bf16.mxu0 0
  %122 = vmatpush1.bf16.msra.mxu0 0
  %123 = vmatprep.subr.bf16.mxu0 0
  %124 = vmatpush1.bf16.msra.mxu0 0
  %125 = vmatprep.subr.bf16.mxu0 0
  %126 = vmatpush1.bf16.msra.mxu0 0
  %127 = vmatprep.subr.bf16.mxu0 0
  %128 = vmatpush1.bf16.msra.mxu0 0
  %129 = vmatprep.mubr.bf16.mxu0 0
  %130 = vmatmul.mubr.bf16.gmra.mrb[0].mxu0 %v95
  %v131 = vpop.f32.mrb[0].mxu0
  %v132 = vadd.f32 0.0, %v131
  %v133 = vpop.f32.mrb[0].mxu0
  %v134 = vpop.f32.mrb[0].mxu0
  %v135 = vadd.f32 0.0, %v134
  %v136 = vpop.f32.mrb[0].mxu0
  %137 = vdwg.mxu0
  %v138 = vadd.f32 %v76, %v132
  %v139 = vadd.f32 %v77, %v135
  %140 = vst [vmem:[#allocation2] sm:$0xff] %v138
  %141 = vst [vmem:[#allocation2 + $0x8] sm:$0xff] %v139
  // Predicated region
  $region26: #{_lambda_.18} parent=0 // pred_check
    %p142 = pneg %p21
  $region27: #{_lambda_.18} parent=0 // pred_check_branch
    %144 = sbr.rel (%p142) target = $region29
  $region28: #{_lambda_.18} parent=0 // pred_region
    %v145 = vld [vmem:[#allocation2] sm:$0xff]
    %v146 = vld [vmem:[#allocation2 + $0x8] sm:$0xff]
    %v147 = vld [vmem:[%s2] sm:$0x1]
    %v149 = vlaneseq
    %v150 = vshrl.u32 %v149, 7
    %v151 = vsub.s32 0, %v150
    %v152 = vrot.slane %v147, %v151
    %v154 = vadd.f32 %v145, %v152
    %v155 = vadd.f32 %v146, %v152
    %v156 = vmul.f32 %v154, 1.702
    %v157 = vmul.f32 %v155, 1.702
    %v158 = vxor.u32 %v156, 2147483648
    %v159 = vxor.u32 %v157, 2147483648
    %v160 = vmul.f32 %v158, 1.442695
    %v161 = vpow.pop %v160
    %v162 = vmul.f32 %v159, 1.442695
    %v163 = vpow.pop %v162
    %v164 = vadd.f32 %v161, 1.0
    %v165 = vadd.f32 %v163, 1.0
    %v166 = vrcp.pop %v164
    %v167 = vmul.f32 1.0, %v166
    %v168 = vrcp.pop %v165
    %v169 = vmul.f32 1.0, %v168
    %v170 = vmul.f32 %v154, %v167
    %v171 = vmul.f32 %v155, %v169
    %v172 = vpack.c.bf16 %v171, %v170
    %v174 = vunpack.c.l.b16 %v172
    %v175 = vunpack.c.h.b16 %v172
    %v176 = vpack.c.b16 %v174, %v174
    %v177 = vpack.c.b16 %v175, %v175
    %180 = vst [vmem:[%s5] sm:$0xf] %v176
    %181 = vst [vmem:[%s5 + $0x4] sm:$0xf] %v177
  $region29: #{_lambda_.18} parent=0 // pred_fallthru
    _
  // Predicated region
  $region30: #{_lambda_.18} parent=0 // pred_check
    _
  $region31: #{_lambda_.18} parent=0 // pred_check_branch
    %183 = sbr.rel (0) target = $region33
  $region32: #{_lambda_.18} parent=0 // pred_region
    _
  $region33: #{_lambda_.18} parent=0 // pred_fallthru
    _
  // Predicated region
  $region34: #{_lambda_.18} parent=0 // pred_check
    _
  $region35: #{_lambda_.18} parent=0 // pred_check_branch
    %185 = sbr.rel (0) target = $region37
  $region36: #{_lambda_.18} parent=0 // pred_region
    _
  $region37: #{_lambda_.18} parent=0 // pred_fallthru
    _

// kernel: _lambda_.19
$region0: #{_lambda_.19}
  #allocation0 [shape = 'u32[]', space=smem, size = 0x4, offset = 0x4, fixed_abs, tag = 'smem constant byte address 0x4 - core index']
  #allocation1 [shape = 'u32[144,128]{1,0:T(1,128)}', space=vmem, size = 0x12000, scoped, tag = 'internal scratch']
  #allocation2 [shape = 'f32[16,32]{1,0:T(8,128)}', space=vmem, size = 0x2000, scoped, tag = 'scratch operand']
  %s0 = inlined_call_operand.vmem [shape: bf16[16,128], index: 0, kind: input, shape index: {}]
  %s1 = inlined_call_operand.vmem [shape: bf16[128,32], index: 1, kind: input, shape index: {}]
  %s2 = inlined_call_operand.vmem [shape: f32[1,32], index: 2, kind: input, shape index: {}]
  %s3 = inlined_call_operand.vmem [shape: f32[16,32], index: 3, kind: input, shape index: {}]
  %s4 = inlined_call_operand.vmem [shape: f32[16,32], index: 4, kind: output, shape index: {}]
  %s5 = sld [smem:[#allocation0]]
  $region34: #{_lambda_.19} parent=0
    _
  %s7 = ssub.s32 1, %s5
  %s8 = scalar_select 0, %s7, %s5
  // Predicated region
  $region2: #{_lambda_.19} parent=0 // pred_check
    _
  $region3: #{_lambda_.19} parent=0 // pred_check_branch
    %10 = sbr.rel (0) target = $region5
  $region4: #{_lambda_.19} parent=0 // pred_region
    _
  $region5: #{_lambda_.19} parent=0 // pred_fallthru
    _
  // Predicated region
  $region6: #{_lambda_.19} parent=0 // pred_check
    _
  $region7: #{_lambda_.19} parent=0 // pred_check_branch
    %12 = sbr.rel (0) target = $region9
  $region8: #{_lambda_.19} parent=0 // pred_region
    _
  $region9: #{_lambda_.19} parent=0 // pred_fallthru
    _
  // Predicated region
  $region10: #{_lambda_.19} parent=0 // pred_check
    _
  $region11: #{_lambda_.19} parent=0 // pred_check_branch
    %14 = sbr.rel (0) target = $region13
  $region12: #{_lambda_.19} parent=0 // pred_region
    _
  $region13: #{_lambda_.19} parent=0 // pred_fallthru
    _
  // Predicated region
  $region14: #{_lambda_.19} parent=0 // pred_check
    _
  $region15: #{_lambda_.19} parent=0 // pred_check_branch
    %16 = sbr.rel (0) target = $region17
  $region16: #{_lambda_.19} parent=0 // pred_region
    _
  $region17: #{_lambda_.19} parent=0 // pred_fallthru
    _
  %p18 = scmp.eq.s32.totalorder 0, 0
  // Predicated region
  $region18: #{_lambda_.19} parent=0 // pred_check
    %p19 = pneg %p18
  $region19: #{_lambda_.19} parent=0 // pred_check_branch
    %21 = sbr.rel (%p19) target = $region21
  $region20: #{_lambda_.19} parent=0 // pred_region
    %vm22 = vcmask 261120
    %23 = vst.msk [vmem:[#allocation2] sm:$0xff] %vm22, 0.0
    %24 = vst.msk [vmem:[#allocation2 + $0x8] sm:$0xff] %vm22, 0.0
  $region21: #{_lambda_.19} parent=0 // pred_fallthru
    _
  %v25 = vld [vmem:[%s0] sm:$0xf]
  %v26 = vld [vmem:[%s0 + $0x4] sm:$0xf]
  %v27 = vld [vmem:[#allocation2] sm:$0xff]
  %v28 = vld [vmem:[#allocation2 + $0x8] sm:$0xff]
  %v29 = vld [vmem:[%s1] sm:$0xf]
  %v30 = vld [vmem:[%s1 + $0x4] sm:$0xf]
  %v31 = vld [vmem:[%s1 + $0x8] sm:$0xf]
  %v32 = vld [vmem:[%s1 + $0xc] sm:$0xf]
  %v33 = vld [vmem:[%s1 + $0x10] sm:$0xf]
  %v34 = vld [vmem:[%s1 + $0x14] sm:$0xf]
  %v35 = vld [vmem:[%s1 + $0x18] sm:$0xf]
  %v36 = vld [vmem:[%s1 + $0x1c] sm:$0xf]
  %v37 = vld [vmem:[%s1 + $0x20] sm:$0xf]
  %v38 = vld [vmem:[%s1 + $0x24] sm:$0xf]
  %v39 = vld [vmem:[%s1 + $0x28] sm:$0xf]
  %v40 = vld [vmem:[%s1 + $0x2c] sm:$0xf]
  %v41 = vld [vmem:[%s1 + $0x30] sm:$0xf]
  %v42 = vld [vmem:[%s1 + $0x34] sm:$0xf]
  %v43 = vld [vmem:[%s1 + $0x38] sm:$0xf]
  %v44 = vld [vmem:[%s1 + $0x3c] sm:$0xf]
  %v47 = vunpack.c.l.b16 %v25
  %v48 = vunpack.c.l.b16 %v26
  %v49 = vpack.c.b16 %v48, %v47
  %v67 = vunpack.c.l.b16 %v29
  %v68 = vunpack.c.l.b16 %v30
  %v69 = vunpack.c.l.b16 %v31
  %v70 = vunpack.c.l.b16 %v32
  %v71 = vunpack.c.l.b16 %v33
  %v72 = vunpack.c.l.b16 %v34
  %v73 = vunpack.c.l.b16 %v35
  %v74 = vunpack.c.l.b16 %v36
  %v75 = vunpack.c.l.b16 %v37
  %v76 = vunpack.c.l.b16 %v38
  %v77 = vunpack.c.l.b16 %v39
  %v78 = vunpack.c.l.b16 %v40
  %v79 = vunpack.c.l.b16 %v41
  %v80 = vunpack.c.l.b16 %v42
  %v81 = vunpack.c.l.b16 %v43
  %v82 = vunpack.c.l.b16 %v44
  %v83 = vpack.c.b16 %v68, %v67
  %v84 = vpack.c.b16 %v70, %v69
  %v85 = vpack.c.b16 %v72, %v71
  %v86 = vpack.c.b16 %v74, %v73
  %v87 = vpack.c.b16 %v76, %v75
  %v88 = vpack.c.b16 %v78, %v77
  %v89 = vpack.c.b16 %v80, %v79
  %v90 = vpack.c.b16 %v82, %v81
  %99 = vmatprep.subr.bf16.mxu0 0
  %100 = vmatpush1.bf16.msra.mxu0 %v83
  %101 = vmatprep.subr.bf16.mxu0 0
  %102 = vmatpush1.bf16.msra.mxu0 %v84
  %103 = vmatprep.subr.bf16.mxu0 0
  %104 = vmatpush1.bf16.msra.mxu0 %v85
  %105 = vmatprep.subr.bf16.mxu0 0
  %106 = vmatpush1.bf16.msra.mxu0 %v86
  %107 = vmatprep.subr.bf16.mxu0 0
  %108 = vmatpush1.bf16.msra.mxu0 %v87
  %109 = vmatprep.subr.bf16.mxu0 0
  %110 = vmatpush1.bf16.msra.mxu0 %v88
  %111 = vmatprep.subr.bf16.mxu0 0
  %112 = vmatpush1.bf16.msra.mxu0 %v89
  %113 = vmatprep.subr.bf16.mxu0 0
  %114 = vmatpush1.bf16.msra.mxu0 %v90
  %115 = vmatprep.subr.bf16.mxu0 0
  %116 = vmatpush1.bf16.msra.mxu0 0
  %117 = vmatprep.subr.bf16.mxu0 0
  %118 = vmatpush1.bf16.msra.mxu0 0
  %119 = vmatprep.subr.bf16.mxu0 0
  %120 = vmatpush1.bf16.msra.mxu0 0
  %121 = vmatprep.subr.bf16.mxu0 0
  %122 = vmatpush1.bf16.msra.mxu0 0
  %123 = vmatprep.subr.bf16.mxu0 0
  %124 = vmatpush1.bf16.msra.mxu0 0
  %125 = vmatprep.subr.bf16.mxu0 0
  %126 = vmatpush1.bf16.msra.mxu0 0
  %127 = vmatprep.subr.bf16.mxu0 0
  %128 = vmatpush1.bf16.msra.mxu0 0
  %129 = vmatprep.subr.bf16.mxu0 0
  %130 = vmatpush1.bf16.msra.mxu0 0
  %131 = vmatprep.mubr.bf16.mxu0 0
  %132 = vmatmul.mubr.bf16.gmra.mrb[0].mxu0 %v49
  %v133 = vpop.f32.mrb[0].mxu0
  %v134 = vadd.f32 0.0, %v133
  %v135 = vpop.f32.mrb[0].mxu0
  %v136 = vpop.f32.mrb[0].mxu0
  %v137 = vadd.f32 0.0, %v136
  %v138 = vpop.f32.mrb[0].mxu0
  %139 = vdwg.mxu0
  %v140 = vadd.f32 %v27, %v134
  %v141 = vadd.f32 %v28, %v137
  %vm142 = vcmask 261120
  %143 = vst.msk [vmem:[#allocation2] sm:$0xff] %vm142, %v140
  %144 = vst.msk [vmem:[#allocation2 + $0x8] sm:$0xff] %vm142, %v141
  // Predicated region
  $region22: #{_lambda_.19} parent=0 // pred_check
    %p145 = pneg %p18
  $region23: #{_lambda_.19} parent=0 // pred_check_branch
    %147 = sbr.rel (%p145) target = $region25
  $region24: #{_lambda_.19} parent=0 // pred_region
    %v148 = vld [vmem:[#allocation2] sm:$0xff]
    %v149 = vld [vmem:[#allocation2 + $0x8] sm:$0xff]
    %v150 = vld [vmem:[%s2] sm:$0x1]
    %v152 = vlaneseq
    %v153 = vshrl.u32 %v152, 7
    %v154 = vsub.s32 0, %v153
    %v155 = vrot.slane %v150, %v154
    %v157 = vadd.f32 %v148, %v155
    %v158 = vadd.f32 %v149, %v155
    %v159 = vld [vmem:[%s3] sm:$0xff]
    %v160 = vld [vmem:[%s3 + $0x8] sm:$0xff]
    %v161 = vadd.f32 %v157, %v159
    %v162 = vadd.f32 %v158, %v160
    %163 = vst.msk [vmem:[%s4] sm:$0xff] %vm142, %v161
    %164 = vst.msk [vmem:[%s4 + $0x8] sm:$0xff] %vm142, %v162
  $region25: #{_lambda_.19} parent=0 // pred_fallthru
    _
  // Predicated region
  $region26: #{_lambda_.19} parent=0 // pred_check
    _
  $region27: #{_lambda_.19} parent=0 // pred_check_branch
    %166 = sbr.rel (0) target = $region29
  $region28: #{_lambda_.19} parent=0 // pred_region
    _
  $region29: #{_lambda_.19} parent=0 // pred_fallthru
    _
  // Predicated region
  $region30: #{_lambda_.19} parent=0 // pred_check
    _
  $region31: #{_lambda_.19} parent=0 // pred_check_branch
    %168 = sbr.rel (0) target = $region33
  $region32: #{_lambda_.19} parent=0 // pred_region
    _
  $region33: #{_lambda_.19} parent=0 // pred_fallthru
    _

// kernel: _lambda_.25
$region0: #{_lambda_.25}
  #allocation0 [shape = 'u32[]', space=smem, size = 0x4, offset = 0x4, fixed_abs, tag = 'smem constant byte address 0x4 - core index']
  #allocation1 [shape = 'u32[144,128]{1,0:T(1,128)}', space=vmem, size = 0x12000, scoped, tag = 'internal scratch']
  #allocation2 [shape = 'f32[8,16]{1,0:T(8,128)}', space=vmem, size = 0x1000, scoped, tag = 'scratch operand']
  %s0 = inlined_call_operand.vmem [shape: f32[8,32], index: 0, kind: input, shape index: {}]
  %s1 = inlined_call_operand.vmem [shape: bf16[32,16], index: 1, kind: input, shape index: {}]
  %s2 = inlined_call_operand.vmem [shape: f32[1,16], index: 2, kind: input, shape index: {}]
  %s3 = inlined_call_operand.vmem [shape: f32[1,32], index: 3, kind: input, shape index: {}]
  %s4 = inlined_call_operand.vmem [shape: f32[1,32], index: 4, kind: input, shape index: {}]
  %s5 = inlined_call_operand.vmem [shape: f32[8,16], index: 5, kind: output, shape index: {}]
  %s6 = sld [smem:[#allocation0]]
  $region38: #{_lambda_.25} parent=0
    _
  %s8 = ssub.s32 1, %s6
  %s9 = scalar_select 0, %s8, %s6
  // Predicated region
  $region2: #{_lambda_.25} parent=0 // pred_check
    _
  $region3: #{_lambda_.25} parent=0 // pred_check_branch
    %11 = sbr.rel (0) target = $region5
  $region4: #{_lambda_.25} parent=0 // pred_region
    _
  $region5: #{_lambda_.25} parent=0 // pred_fallthru
    _
  // Predicated region
  $region6: #{_lambda_.25} parent=0 // pred_check
    _
  $region7: #{_lambda_.25} parent=0 // pred_check_branch
    %13 = sbr.rel (0) target = $region9
  $region8: #{_lambda_.25} parent=0 // pred_region
    _
  $region9: #{_lambda_.25} parent=0 // pred_fallthru
    _
  // Predicated region
  $region10: #{_lambda_.25} parent=0 // pred_check
    _
  $region11: #{_lambda_.25} parent=0 // pred_check_branch
    %15 = sbr.rel (0) target = $region13
  $region12: #{_lambda_.25} parent=0 // pred_region
    _
  $region13: #{_lambda_.25} parent=0 // pred_fallthru
    _
  // Predicated region
  $region14: #{_lambda_.25} parent=0 // pred_check
    _
  $region15: #{_lambda_.25} parent=0 // pred_check_branch
    %17 = sbr.rel (0) target = $region17
  $region16: #{_lambda_.25} parent=0 // pred_region
    _
  $region17: #{_lambda_.25} parent=0 // pred_fallthru
    _
  // Predicated region
  $region18: #{_lambda_.25} parent=0 // pred_check
    _
  $region19: #{_lambda_.25} parent=0 // pred_check_branch
    %19 = sbr.rel (0) target = $region21
  $region20: #{_lambda_.25} parent=0 // pred_region
    _
  $region21: #{_lambda_.25} parent=0 // pred_fallthru
    _
  %p21 = scmp.eq.s32.totalorder 0, 0
  // Predicated region
  $region22: #{_lambda_.25} parent=0 // pred_check
    %p22 = pneg %p21
  $region23: #{_lambda_.25} parent=0 // pred_check_branch
    %24 = sbr.rel (%p22) target = $region25
  $region24: #{_lambda_.25} parent=0 // pred_region
    %vm25 = vcmask 130048
    %26 = vst.msk [vmem:[#allocation2] sm:$0xff] %vm25, 0.0
  $region25: #{_lambda_.25} parent=0 // pred_fallthru
    _
  %v27 = vld [vmem:[%s0] sm:$0xff]
  %vm28 = vcmask 261120
  %v29 = vsel %vm28, %v27, 0.0
  %30 = vadd.xlane.f32.xlu0 %v29
  %v31 = vpop.xlane.xlu0 %30
  %v32 = vrcp.pop 32.0
  %v33 = vmul.f32 %v31, %v32
  %v34 = vsub.f32 %v27, %v33
  %v35 = vmul.f32 %v34, %v34
  %v36 = vsel %vm28, %v35, 0.0
  %37 = vadd.xlane.f32.xlu0 %v36
  %v38 = vpop.xlane.xlu0 %37
  %v39 = vmul.f32 %v38, %v32
  %v40 = vadd.f32 %v39, 1e-05
  %v41 = vrsqrt.pop %v40
  %v42 = vmul.f32 %v34, %v41
  %v43 = vld [vmem:[%s3] sm:$0x1]
  %v45 = vlaneseq
  %v46 = vshrl.u32 %v45, 7
  %v47 = vsub.s32 0, %v46
  %v48 = vrot.slane %v43, %v47
  %v50 = vmul.f32 %v42, %v48
  %v51 = vld [vmem:[%s4] sm:$0x1]
  %v53 = vlaneseq
  %v54 = vshrl.u32 %v53, 7
  %v55 = vsub.s32 0, %v54
  %v56 = vrot.slane %v51, %v55
  %v58 = vadd.f32 %v50, %v56
  %v59 = vpack.c.bf16 %v58, %v58
  %v60 = vld [vmem:[#allocation2] sm:$0xff]
  %v61 = vld [vmem:[%s1] sm:$0xf]
  %v62 = vld [vmem:[%s1 + $0x4] sm:$0xf]
  %v63 = vld [vmem:[%s1 + $0x8] sm:$0xf]
  %v64 = vld [vmem:[%s1 + $0xc] sm:$0xf]
  %v69 = vunpack.c.l.b16 %v61
  %v70 = vunpack.c.l.b16 %v62
  %v71 = vunpack.c.l.b16 %v63
  %v72 = vunpack.c.l.b16 %v64
  %v73 = vpack.c.b16 %v70, %v69
  %v74 = vpack.c.b16 %v72, %v71
  %v78 = vsel %vm28, %v59, 0
  %80 = vmatprep.subr.bf16.mxu0 0
  %81 = vmatpush1.bf16.msra.mxu0 %v73
  %82 = vmatprep.subr.bf16.mxu0 0
  %83 = vmatpush1.bf16.msra.mxu0 %v74
  %84 = vmatprep.subr.bf16.mxu0 0
  %85 = vmatpush1.bf16.msra.mxu0 0
  %86 = vmatprep.subr.bf16.mxu0 0
  %87 = vmatpush1.bf16.msra.mxu0 0
  %88 = vmatprep.subr.bf16.mxu0 0
  %89 = vmatpush1.bf16.msra.mxu0 0
  %90 = vmatprep.subr.bf16.mxu0 0
  %91 = vmatpush1.bf16.msra.mxu0 0
  %92 = vmatprep.subr.bf16.mxu0 0
  %93 = vmatpush1.bf16.msra.mxu0 0
  %94 = vmatprep.subr.bf16.mxu0 0
  %95 = vmatpush1.bf16.msra.mxu0 0
  %96 = vmatprep.subr.bf16.mxu0 0
  %97 = vmatpush1.bf16.msra.mxu0 0
  %98 = vmatprep.subr.bf16.mxu0 0
  %99 = vmatpush1.bf16.msra.mxu0 0
  %100 = vmatprep.subr.bf16.mxu0 0
  %101 = vmatpush1.bf16.msra.mxu0 0
  %102 = vmatprep.subr.bf16.mxu0 0
  %103 = vmatpush1.bf16.msra.mxu0 0
  %104 = vmatprep.subr.bf16.mxu0 0
  %105 = vmatpush1.bf16.msra.mxu0 0
  %106 = vmatprep.subr.bf16.mxu0 0
  %107 = vmatpush1.bf16.msra.mxu0 0
  %108 = vmatprep.subr.bf16.mxu0 0
  %109 = vmatpush1.bf16.msra.mxu0 0
  %110 = vmatprep.subr.bf16.mxu0 0
  %111 = vmatpush1.bf16.msra.mxu0 0
  %112 = vmatprep.mubr.bf16.mxu0 0
  %113 = vmatmul.mubr.bf16.gmra.mrb[0].mxu0 %v78
  %v114 = vpop.f32.mrb[0].mxu0
  %v115 = vadd.f32 0.0, %v114
  %v116 = vpop.f32.mrb[0].mxu0
  %v117 = vpop.f32.mrb[0].mxu0
  %v118 = vpop.f32.mrb[0].mxu0
  %119 = vdwg.mxu0
  %v120 = vadd.f32 %v60, %v115
  %vm121 = vcmask 130048
  %122 = vst.msk [vmem:[#allocation2] sm:$0xff] %vm121, %v120
  // Predicated region
  $region26: #{_lambda_.25} parent=0 // pred_check
    %p123 = pneg %p21
  $region27: #{_lambda_.25} parent=0 // pred_check_branch
    %125 = sbr.rel (%p123) target = $region29
  $region28: #{_lambda_.25} parent=0 // pred_region
    %v126 = vld [vmem:[#allocation2] sm:$0xff]
    %v127 = vld [vmem:[%s2] sm:$0x1]
    %v129 = vlaneseq
    %v130 = vshrl.u32 %v129, 7
    %v131 = vsub.s32 0, %v130
    %v132 = vrot.slane %v127, %v131
    %v134 = vadd.f32 %v126, %v132
    %135 = vst.msk [vmem:[%s5] sm:$0xff] %vm121, %v134
  $region29: #{_lambda_.25} parent=0 // pred_fallthru
    _
  // Predicated region
  $region30: #{_lambda_.25} parent=0 // pred_check
    _
  $region31: #{_lambda_.25} parent=0 // pred_check_branch
    %137 = sbr.rel (0) target = $region33
  $region32: #{_lambda_.25} parent=0 // pred_region
    _
  $region33: #{_lambda_.25} parent=0 // pred_fallthru
    _
  // Predicated region
  $region34: #{_lambda_.25} parent=0 // pred_check
    _
  $region35: #{_lambda_.25} parent=0 // pred_check_branch
    %139 = sbr.rel (0) target = $region37
  $region36: #{_lambda_.25} parent=0 // pred_region
    _
  $region37: #{_lambda_.25} parent=0 // pred_fallthru
    _

</llo_original>
